<compile_context>
chip_gen: v7x
topology: tpu7x:2x2x1
jax: 0.10.0
libtpu: 0.0.40
codegen_flags: <defaults>
</compile_context>

<pallas_src>
import functools

import numpy as np
import jax
import jax.numpy as jnp
from jax.experimental import pallas as pl
from jax.experimental.pallas import tpu as pltpu

# ----------------------- synthetic "parameters" module -----------------------
IMG_SIZE = 16            # args.img_size
DISTANCE = 0.1           # actual_situation.distance        (synthetic)
WAVE_LENGTH = 632.8e-9   # actual_situation.wave_length     (synthetic)
SCREEN_LENGTH = 0.2      # actual_situation.screen_length   (synthetic)
# TODO(synk): actual_situation.manufacturing_error branch references an
# undefined self.phase plus host RNG in the reference code; assumed False.

QMIN, QMAX = 0.0, 255.0
QEPS = 1e-12


def _build_H(n: int) -> np.ndarray:
    """DiffractiveLayer.__init__: angular-spectrum transfer function H
    (already fftshifted, as in the reference)."""
    wave_num = 2 * 3.14159 / WAVE_LENGTH          # matches reference constant
    dx = SCREEN_LENGTH / n
    fx_list = np.arange(-1.0 / (2 * dx), 1.0 / (2 * dx), 1.0 / SCREEN_LENGTH)
    ii, jj = np.meshgrid(np.arange(n), np.arange(n), indexing="ij")
    phi = (1.0 - (np.square(WAVE_LENGTH * fx_list[ii])
                  + np.square(WAVE_LENGTH * fx_list[jj]))).astype(np.complex64)
    H = np.exp(1j * wave_num * DISTANCE * np.sqrt(phi))
    return np.fft.fftshift(H, axes=(0, 1)).astype(np.complex64)


def _build_block_operator(n: int, dtype=jnp.bfloat16):
    """Host-precomputed complex-as-real block operator B of shape (2P, 2P),
    P = n*n, such that per channel
        [Re(vec_row x_space) | Im(vec_row x_space)] = [Re(vec_row w) | Im(vec_row w)] @ B
    with M = kron(S G, S G) . diag(vec_row H) . kron(F S, F S)  (F = DFT, G =
    conj(F)/n, S = fftshift permutation; shifts folded in, even n assumed) and
        B = [[ Mr,  Mi ],
             [-Mi,  Mr ]],   Mr/Mi = real/imag of M^T."""
    assert n % 2 == 0, "fftshift == ifftshift folding assumes even n"
    H = _build_H(n).astype(np.complex128)
    jj, kk = np.meshgrid(np.arange(n), np.arange(n), indexing="ij")
    F = np.exp(-2j * np.pi * jj * kk / n)                 # DFT matrix
    G = np.conj(F) / n                                    # inverse-DFT matrix
    S = np.zeros((n, n), dtype=np.complex128)
    S[np.arange(n), (np.arange(n) + n // 2) % n] = 1.0    # fftshift permutation
    FS = F @ S
    SG = S @ G
    # vec_row(A X B) = kron(A, B^T) vec_row(X)
    M = np.kron(SG, SG) @ (H.reshape(-1)[:, None] * np.kron(FS, FS))
    Mt = np.ascontiguousarray(M.T)
    Mr, Mi = Mt.real, Mt.imag
    B = np.block([[Mr, Mi], [-Mi, Mr]])                   # (2P, 2P)
    return jnp.asarray(B, dtype=dtype)


# --------------------------- in-kernel transmission ---------------------------
def _transmission_rows(a1, a2, d2):
    """TransmissionLayer math. Inputs (1, P); output a (4, 2P) lane-dense slab
    with rows [left0 Re|Im, left1 Re|Im, right0 Re|Im, right1 Re|Im]."""
    # utils.dequantize_tensor(utils.quantize_tensor(delta2)) round trip.
    # TODO(synk): exact utils.quantize_tensor impl unavailable; standard uint8
    # min/max affine fake-quant assumed (with eps guard on the scale).
    mn = jnp.min(d2, keepdims=True)
    mx = jnp.max(d2, keepdims=True)
    scale = jnp.maximum((mx - mn) / (QMAX - QMIN), QEPS)
    inv_scale = 1.0 / scale
    zp = jnp.clip(jnp.round(QMIN - mn * inv_scale), QMIN, QMAX)
    q = jnp.clip(jnp.round(zp + d2 * inv_scale), QMIN, QMAX)
    d2q = scale * (q - zp)

    cos_d2 = jnp.cos(d2q * 0.5)
    sin_d2 = jnp.sin(d2q * 0.5)
    cos_a1 = jnp.cos(a1)
    sin_a1 = jnp.sin(a1)
    sub = a1 - a2
    cos_sub = jnp.cos(sub)
    sin_sub = jnp.sin(sub)

    # de-duplicated products reused across the 4 complex output rows
    cs_sd = cos_sub * sin_d2
    ss_sd = sin_sub * sin_d2
    ca_cd = cos_a1 * cos_d2
    sa_cd = sin_a1 * cos_d2

    l0 = jnp.concatenate([-cs_sd, -ca_cd], axis=-1)       # left  ch0 [Re|Im]
    l1 = jnp.concatenate([-ss_sd, sa_cd], axis=-1)        # left  ch1
    r0 = jnp.concatenate([ss_sd, sa_cd], axis=-1)         # right ch0
    r1 = jnp.concatenate([-cs_sd, ca_cd], axis=-1)        # right ch1
    return jnp.concatenate([l0, l1, r0, r1], axis=0)      # (4, 2P)


# ------------------------------- Pallas kernels --------------------------------
def _dt_fused_kernel(slab_ref, op_ref, out_ref, *, p):
    # slab rows: [waves ch0 Re|Im, waves ch1 Re|Im, alpha1|alpha2, delta2|delta2]
    xs = slab_ref[0:2, :].astype(jnp.bfloat16)             # (2, 2P)
    # single bf16 MXU matmul, f32 accumulation; result is [Re(y) | Im(y)]
    y = jnp.dot(xs, op_ref[...], preferred_element_type=jnp.float32)

    a1 = slab_ref[2:3, 0:p]
    a2 = slab_ref[2:3, p:2 * p]
    d2 = slab_ref[3:4, 0:p]
    lr = _transmission_rows(a1, a2, d2)                    # (4, 2P)

    out_ref[...] = jnp.concatenate([y, lr], axis=0)        # one full-slab store


def _transmission_kernel(slab_ref, out_ref, *, p):
    # slab rows: [alpha1|alpha2, delta2|delta2]
    a1 = slab_ref[0:1, 0:p]
    a2 = slab_ref[0:1, p:2 * p]
    d2 = slab_ref[1:2, 0:p]
    out_ref[...] = _transmission_rows(a1, a2, d2)


# --------------------------------- JAX wrapper ---------------------------------
def dt_layer_forward(waves, op, alpha1, alpha2, delta2, *, compute_x_space=True):
    """DTLayer.forward.  Returns (left, right) exactly as the PyTorch module.
    When compute_x_space=True it also returns x_space so the diffractive path
    can be validated (in the reference its values never feed left/right; with
    compute_x_space=False the operator DMA and the matmul are skipped)."""
    n = alpha1.shape[-1]
    p = n * n
    a1 = alpha1.astype(jnp.float32).reshape(1, p)
    a2 = alpha2.astype(jnp.float32).reshape(1, p)
    d2 = delta2.astype(jnp.float32).reshape(1, p)
    params = jnp.concatenate(
        [jnp.concatenate([a1, a2], axis=-1),
         jnp.concatenate([d2, d2], axis=-1)], axis=0)              # (2, 2p)

    vmem = pl.BlockSpec(memory_space=pltpu.MemorySpace.VMEM)

    if compute_x_space:
        wr = jnp.real(waves).astype(jnp.float32).reshape(2, p)
        wi = jnp.imag(waves).astype(jnp.float32).reshape(2, p)
        xs = jnp.concatenate([wr, wi], axis=-1)                    # (2, 2p)
        slab = jnp.concatenate([xs, params], axis=0)               # (4, 2p)
        out = pl.pallas_call(
            functools.partial(_dt_fused_kernel, p=p),
            out_shape=jax.ShapeDtypeStruct((6, 2 * p), jnp.float32),
            in_specs=[vmem, vmem],
            out_specs=vmem,
        )(slab, op)
        xsp, lr = out[0:2], out[2:6]
    else:
        lr = pl.pallas_call(
            functools.partial(_transmission_kernel, p=p),
            out_shape=jax.ShapeDtypeStruct((4, 2 * p), jnp.float32),
            in_specs=[vmem],
            out_specs=vmem,
        )(params)
        xsp = None

    # Complex repack kept only for API parity with the PyTorch module; Pallas /
    # XLA consumers should take the planar lane-dense [Re|Im] slabs directly.
    left = (lr[0:2, 0:p] + 1j * lr[0:2, p:]).astype(jnp.complex64).reshape(2, n, n)
    right = (lr[2:4, 0:p] + 1j * lr[2:4, p:]).astype(jnp.complex64).reshape(2, n, n)
    if compute_x_space:
        x_space = (xsp[:, 0:p] + 1j * xsp[:, p:]).astype(jnp.complex64).reshape(2, n, n)
        return left, right, x_space
    return left, right


# ------------------------------ numpy reference -------------------------------
def _reference_forward(waves_np, H_np, a1_np, a2_np, d2_np):
    w = np.fft.fftshift(waves_np, axes=(1, 2))
    temp = np.fft.fft2(w, axes=(1, 2))
    k_space = temp * H_np[None]
    x_space = np.fft.ifftshift(np.fft.ifft2(k_space, axes=(1, 2)), axes=(1, 2))

    mn, mx = d2_np.min(), d2_np.max()
    scale = max((mx - mn) / (QMAX - QMIN), QEPS)
    zp = np.clip(np.round(QMIN - mn / scale), QMIN, QMAX)
    q = np.clip(np.round(zp + d2_np / scale), QMIN, QMAX)
    d2q = scale * (q - zp)

    cd, sd = np.cos(d2q / 2), np.sin(d2q / 2)
    ca, sa = np.cos(a1_np), np.sin(a1_np)
    cs, ss = np.cos(a1_np - a2_np), np.sin(a1_np - a2_np)
    left = np.stack([-cs * sd + 1j * (-ca * cd), -ss * sd + 1j * (sa * cd)], 0)
    right = np.stack([ss * sd + 1j * (sa * cd), -cs * sd + 1j * (ca * cd)], 0)
    return left, right, x_space


# ---------------------------------- main --------------------------------------
if __name__ == "__main__":
    n = IMG_SIZE
    key = jax.random.PRNGKey(0)
    k1, k2, k3, k4, k5 = jax.random.split(key, 5)

    # input optical field: complex64, shape (2, N, N)
    waves = (jax.random.normal(k1, (2, n, n), jnp.float32)
             + 1j * jax.random.normal(k2, (2, n, n), jnp.float32)
             ).astype(jnp.complex64)

    # TransmissionLayer learnable params: 2*pi*uniform(0,1), shape (N, N)
    alpha1 = (2.0 * jnp.pi * jax.random.uniform(k3, (n, n))).astype(jnp.float32)
    alpha2 = (2.0 * jnp.pi * jax.random.uniform(k4, (n, n))).astype(jnp.float32)
    delta2 = (2.0 * jnp.pi * jax.random.uniform(k5, (n, n))).astype(jnp.float32)

    # host-precomputed bf16 block operator (shifts + FFTs + H folded in)
    op = _build_block_operator(n, dtype=jnp.bfloat16)

    fwd_full = jax.jit(functools.partial(dt_layer_forward, compute_x_space=True))
    fwd_lite = jax.jit(functools.partial(dt_layer_forward, compute_x_space=False))

    left, right, x_space = fwd_full(waves, op, alpha1, alpha2, delta2)
    jax.block_until_ready((left, right, x_space))
    left_l, right_l = fwd_lite(waves, op, alpha1, alpha2, delta2)
    jax.block_until_ready((left_l, right_l))

    # sanity check vs float64 numpy reference.  x_space tolerance covers the
    # bf16 operator/field quantization (f32-accumulated 512-term dots);
    # left/right tolerance covers at most one fake-quant rounding-step flip.
    l_ref, r_ref, x_ref = _reference_forward(
        np.asarray(waves, dtype=np.complex128),
        _build_H(n).astype(np.complex128),
        np.asarray(alpha1, dtype=np.float64),
        np.asarray(alpha2, dtype=np.float64),
        np.asarray(delta2, dtype=np.float64))
    np.testing.assert_allclose(np.asarray(x_space), x_ref, atol=1e-1)
    np.testing.assert_allclose(np.asarray(left), l_ref, atol=5e-2)
    np.testing.assert_allclose(np.asarray(right), r_ref, atol=5e-2)
    np.testing.assert_allclose(np.asarray(left_l), l_ref, atol=5e-2)
    np.testing.assert_allclose(np.asarray(right_l), r_ref, atol=5e-2)

    print("KERNEL_OK")
</pallas_src>

<mosaic_0001>
module attributes {stable_mosaic.version = 11 : i64} {
  func.func @_dt_fused_kernel(%arg0: memref<4x512xf32, #tpu.memory_space<vmem>>, %arg1: memref<512x512xbf16, #tpu.memory_space<vmem>>, %arg2: memref<6x512xf32, #tpu.memory_space<vmem>>) attributes {dimension_semantics = [], scalar_prefetch = 0 : i64, scratch_operands = 0 : i64, tpu.core_type = #tpu.core_type<tc>} {
    %c0 = arith.constant 0 : index
    %c0_0 = arith.constant 0 : index
    %0 = vector.load %arg0[%c0, %c0_0] : memref<4x512xf32, #tpu.memory_space<vmem>>, vector<2x512xf32>
    %1 = arith.truncf %0 : vector<2x512xf32> to vector<2x512xbf16>
    %c0_1 = arith.constant 0 : index
    %c0_2 = arith.constant 0 : index
    %2 = vector.load %arg1[%c0_1, %c0_2] : memref<512x512xbf16, #tpu.memory_space<vmem>>, vector<512x512xbf16>
    %cst = arith.constant dense<0.000000e+00> : vector<2x512xf32>
    %3 = tpu.matmul %1, %2, %cst {dimension_numbers = #tpu.dot_dimension_numbers<[1], [0], [0], [1], [0, 0, 1, 1], [], []>} : vector<2x512xbf16>, vector<512x512xbf16>, vector<2x512xf32> -> vector<2x512xf32>
    %c2 = arith.constant 2 : index
    %c0_3 = arith.constant 0 : index
    %4 = vector.load %arg0[%c2, %c0_3] : memref<4x512xf32, #tpu.memory_space<vmem>>, vector<1x256xf32>
    %c2_4 = arith.constant 2 : index
    %c256 = arith.constant 256 : index
    %5 = vector.load %arg0[%c2_4, %c256] : memref<4x512xf32, #tpu.memory_space<vmem>>, vector<1x256xf32>
    %c3 = arith.constant 3 : index
    %c0_5 = arith.constant 0 : index
    %6 = vector.load %arg0[%c3, %c0_5] : memref<4x512xf32, #tpu.memory_space<vmem>>, vector<1x256xf32>
    %7 = vector.shape_cast %6 : vector<1x256xf32> to vector<1x1x256xf32>
    %cst_6 = arith.constant dense<0x7F800000> : vector<1xf32>
    %8 = vector.multi_reduction <minimumf>, %7, %cst_6 [1, 2] : vector<1x1x256xf32> to vector<1xf32>
    %9 = vector.shape_cast %8 : vector<1xf32> to vector<1x1x1xf32>
    %10 = vector.extract %9[0, 0, 0] : f32 from vector<1x1x1xf32>
    %11 = vector.broadcast %10 : f32 to vector<1x1xf32>
    %12 = vector.shape_cast %6 : vector<1x256xf32> to vector<1x1x256xf32>
    %cst_7 = arith.constant dense<0xFF800000> : vector<1xf32>
    %13 = vector.multi_reduction <maximumf>, %12, %cst_7 [1, 2] : vector<1x1x256xf32> to vector<1xf32>
    %14 = vector.shape_cast %13 : vector<1xf32> to vector<1x1x1xf32>
    %15 = vector.extract %14[0, 0, 0] : f32 from vector<1x1x1xf32>
    %16 = vector.broadcast %15 : f32 to vector<1x1xf32>
    %17 = arith.subf %16, %11 : vector<1x1xf32>
    %cst_8 = arith.constant 2.550000e+02 : f32
    %18 = vector.broadcast %cst_8 : f32 to vector<1x1xf32>
    %19 = arith.divf %17, %18 : vector<1x1xf32>
    %cst_9 = arith.constant 9.99999996E-13 : f32
    %20 = vector.broadcast %cst_9 : f32 to vector<1x1xf32>
    %21 = arith.maximumf %19, %20 : vector<1x1xf32>
    %cst_10 = arith.constant 1.000000e+00 : f32
    %22 = vector.broadcast %cst_10 : f32 to vector<1x1xf32>
    %23 = arith.divf %22, %21 : vector<1x1xf32>
    %24 = arith.mulf %11, %23 : vector<1x1xf32>
    %cst_11 = arith.constant 0.000000e+00 : f32
    %25 = vector.broadcast %cst_11 : f32 to vector<1x1xf32>
    %26 = arith.subf %25, %24 : vector<1x1xf32>
    %27 = math.roundeven %26 : vector<1x1xf32>
    %cst_12 = arith.constant 0.000000e+00 : f32
    %cst_13 = arith.constant 2.550000e+02 : f32
    %28 = vector.broadcast %cst_12 : f32 to vector<1x1xf32>
    %29 = arith.maximumf %28, %27 : vector<1x1xf32>
    %30 = vector.broadcast %cst_13 : f32 to vector<1x1xf32>
    %31 = arith.minimumf %30, %29 : vector<1x1xf32>
    %32 = vector.broadcast %23 : vector<1x1xf32> to vector<1x256xf32>
    %33 = arith.mulf %6, %32 : vector<1x256xf32>
    %34 = vector.broadcast %31 : vector<1x1xf32> to vector<1x256xf32>
    %35 = arith.addf %34, %33 : vector<1x256xf32>
    %36 = math.roundeven %35 : vector<1x256xf32>
    %cst_14 = arith.constant 0.000000e+00 : f32
    %cst_15 = arith.constant 2.550000e+02 : f32
    %37 = vector.broadcast %cst_14 : f32 to vector<1x256xf32>
    %38 = arith.maximumf %37, %36 : vector<1x256xf32>
    %39 = vector.broadcast %cst_15 : f32 to vector<1x256xf32>
    %40 = arith.minimumf %39, %38 : vector<1x256xf32>
    %41 = vector.broadcast %31 : vector<1x1xf32> to vector<1x256xf32>
    %42 = arith.subf %40, %41 : vector<1x256xf32>
    %43 = vector.broadcast %21 : vector<1x1xf32> to vector<1x256xf32>
    %44 = arith.mulf %43, %42 : vector<1x256xf32>
    %cst_16 = arith.constant 5.000000e-01 : f32
    %45 = vector.broadcast %cst_16 : f32 to vector<1x256xf32>
    %46 = arith.mulf %44, %45 : vector<1x256xf32>
    %47 = math.cos %46 : vector<1x256xf32>
    %cst_17 = arith.constant 5.000000e-01 : f32
    %48 = vector.broadcast %cst_17 : f32 to vector<1x256xf32>
    %49 = arith.mulf %44, %48 : vector<1x256xf32>
    %50 = math.sin %49 : vector<1x256xf32>
    %51 = math.cos %4 : vector<1x256xf32>
    %52 = math.sin %4 : vector<1x256xf32>
    %53 = arith.subf %4, %5 : vector<1x256xf32>
    %54 = math.cos %53 : vector<1x256xf32>
    %55 = math.sin %53 : vector<1x256xf32>
    %56 = arith.mulf %54, %50 : vector<1x256xf32>
    %57 = arith.mulf %55, %50 : vector<1x256xf32>
    %58 = arith.mulf %51, %47 : vector<1x256xf32>
    %59 = arith.mulf %52, %47 : vector<1x256xf32>
    %cst_18 = arith.constant 0.000000e+00 : f32
    %60 = vector.broadcast %cst_18 : f32 to vector<1x256xf32>
    %61 = arith.subf %60, %56 : vector<1x256xf32>
    %cst_19 = arith.constant 0.000000e+00 : f32
    %62 = vector.broadcast %cst_19 : f32 to vector<1x256xf32>
    %63 = arith.subf %62, %58 : vector<1x256xf32>
    %64 = tpu.concatenate %61, %63 in 1 : vector<1x256xf32>, vector<1x256xf32> -> vector<1x512xf32>
    %cst_20 = arith.constant 0.000000e+00 : f32
    %65 = vector.broadcast %cst_20 : f32 to vector<1x256xf32>
    %66 = arith.subf %65, %57 : vector<1x256xf32>
    %67 = tpu.concatenate %66, %59 in 1 : vector<1x256xf32>, vector<1x256xf32> -> vector<1x512xf32>
    %68 = tpu.concatenate %57, %59 in 1 : vector<1x256xf32>, vector<1x256xf32> -> vector<1x512xf32>
    %cst_21 = arith.constant 0.000000e+00 : f32
    %69 = vector.broadcast %cst_21 : f32 to vector<1x256xf32>
    %70 = arith.subf %69, %56 : vector<1x256xf32>
    %71 = tpu.concatenate %70, %58 in 1 : vector<1x256xf32>, vector<1x256xf32> -> vector<1x512xf32>
    %72 = tpu.concatenate %64, %67, %68, %71 in 0 : vector<1x512xf32>, vector<1x512xf32>, vector<1x512xf32>, vector<1x512xf32> -> vector<4x512xf32>
    %73 = tpu.concatenate %3, %72 in 0 : vector<2x512xf32>, vector<4x512xf32> -> vector<6x512xf32>
    %c0_22 = arith.constant 0 : index
    %c0_23 = arith.constant 0 : index
    %74 = vector.load %arg2[%c0_22, %c0_23] : memref<6x512xf32, #tpu.memory_space<vmem>>, vector<6x512xf32>
    tpu.vector_store %arg2[%c0_22, %c0_23], %73 {strides = array<i32>} : memref<6x512xf32, #tpu.memory_space<vmem>>, vector<6x512xf32>,
    return
  }
}

</mosaic_0001>

<llo_original>
// kernel: custom-call.1
$region0: #{custom-call.1}
  %s0 = inlined_call_operand.hbm [shape: c64[2,16,16], index: 0, kind: input, shape index: {}]
  %s1 = inlined_call_operand.vmem [shape: f32[2,16,16], index: 1, kind: output, shape index: {}]
  %s2 = scalar_lea.hbm %s0, 512
  $region1: #{custom-call.1} parent=0
    #allocation0 [shape = 's32[1]{0}', space=sflag, size = 0x4, scoped, tag = 'scoped memory for custom-call.1']
    %3 = vsyncpa [#allocation0], 0
    %s4 = sshll.u32 %s1, 4
    %s5 = int_to_ptr.vmem [resolvable:$true] %s4
    %7 = dma.hbm_to_vmem [thread:$0]  %s2, 512, %s5, [#allocation0]
    %8 = dma.done [#allocation0], 512
    %9 = vsyncpa [#allocation0], 1

// kernel: custom-call
$region0: #{custom-call}
  %s0 = inlined_call_operand.hbm [shape: c64[2,16,16], index: 0, kind: input, shape index: {}]
  %s1 = inlined_call_operand.vmem [shape: f32[2,16,16], index: 1, kind: output, shape index: {}]
  $region1: #{custom-call} parent=0
    #allocation0 [shape = 's32[1]{0}', space=sflag, size = 0x4, scoped, tag = 'scoped memory for custom-call']
    %2 = vsyncpa [#allocation0], 0
    %s3 = sshll.u32 %s1, 4
    %s4 = int_to_ptr.vmem [resolvable:$true] %s3
    %6 = dma.hbm_to_vmem [thread:$0]  %s0, 512, %s4, [#allocation0]
    %7 = dma.done [#allocation0], 512
    %8 = vsyncpa [#allocation0], 1

// kernel: custom-call.4
$region0: #{custom-call.4}
  %s0 = inlined_call_operand.vmem [shape: f32[2,16,16], index: 0, kind: input, shape index: {}]
  %s1 = inlined_call_operand.vmem [shape: f32[2,16,16], index: 1, kind: input, shape index: {}]
  %s2 = inlined_call_operand.hbm [shape: c64[2,16,16], index: 2, kind: output, shape index: {}]
  %s3 = scalar_lea.hbm %s2, 512
  $region1: #{custom-call.4} parent=0
    #allocation0 [shape = 's32[1]{0}', space=sflag, size = 0x4, scoped, tag = 'scoped memory for custom-call.4']
    %4 = vsyncpa [#allocation0], 0
    %s5 = sshll.u32 %s0, 4
    %s6 = int_to_ptr.vmem [resolvable:$true] %s5
    %8 = dma.vmem_to_hbm [thread:$0]  %s6, 512, %s2, [#allocation0]
    %9 = dma.done [#allocation0], 512
    %10 = vsyncpa [#allocation0], 1
  $region2: #{custom-call.4} parent=0
    #allocation1 [shape = 's32[1]{0}', space=sflag, size = 0x4, scoped, tag = 'scoped memory for custom-call.4']
    %11 = vsyncpa [#allocation1], 0
    %s12 = sshll.u32 %s1, 4
    %s13 = int_to_ptr.vmem [resolvable:$true] %s12
    %15 = dma.vmem_to_hbm [thread:$0]  %s13, 512, %s3, [#allocation1]
    %16 = dma.done [#allocation1], 512
    %17 = vsyncpa [#allocation1], 1

// kernel: dt_layer_forward.1
$region0: #{dt_layer_forward.1}
  #allocation0 [shape = 'u32[]', space=smem, size = 0x4, offset = 0x4, fixed_abs, tag = 'smem constant byte address 0x4 - core index']
  #allocation1 [shape = 'u32[144,128]{1,0:T(1,128)}', space=vmem, size = 0x12000, scoped, tag = 'internal scratch']
  %s0 = inlined_call_operand.vmem [shape: f32[4,512], index: 0, kind: input, shape index: {}]
  %s1 = inlined_call_operand.hbm [shape: bf16[512,512], index: 1, kind: input, shape index: {}]
  %s2 = inlined_call_operand.vmem [shape: f32[6,512], index: 2, kind: output, shape index: {}]
  %s3 = sld [smem:[#allocation0]]
  $region22: #{dt_layer_forward.1} parent=0
    _
  %s5 = ssub.s32 1, %s3
  %s6 = scalar_select 0, %s5, %s3
  $region1: #{dt_layer_forward.1} parent=0
    #allocation2 [shape = 'u8[524288]{0}', space=vmem, size = 0x80000, scoped, tag = 'input window, operand 1, single buffered']
    #allocation3 [shape = 's32[1]{0}', space=sflag, size = 0x4, scoped, tag = 'scoped memory for dt_layer_forward.1']
    %7 = vsyncpa [#allocation3], 0
    // Predicated region
    $region2: #{dt_layer_forward.1} parent=1 // pred_check
      _
    $region3: #{dt_layer_forward.1} parent=1 // pred_check_branch
      %9 = sbr.rel (0) target = $region5
    $region4: #{dt_layer_forward.1} parent=1 // pred_region
      _
    $region5: #{dt_layer_forward.1} parent=1 // pred_fallthru
      _
    // Predicated region
    $region6: #{dt_layer_forward.1} parent=1 // pred_check
      _
    $region7: #{dt_layer_forward.1} parent=1 // pred_check_branch
      %11 = sbr.rel (0) target = $region9
    $region8: #{dt_layer_forward.1} parent=1 // pred_region
      %s13 = ssub.s32 16384, 16384
      %14 = vsyncadd [#allocation3], %s13
      %s15 = sshll.u32 [#allocation2], 4
      %s16 = int_to_ptr.vmem [resolvable:$true] %s15
      %21 = dma.hbm_to_vmem [thread:$0]  %s1, 16384, %s16, [#allocation3], 256, 256, 16
    $region9: #{dt_layer_forward.1} parent=1 // pred_fallthru
      _
    // Predicated region
    $region10: #{dt_layer_forward.1} parent=1 // pred_check
      _
    $region11: #{dt_layer_forward.1} parent=1 // pred_check_branch
      %23 = sbr.rel (0) target = $region13
    $region12: #{dt_layer_forward.1} parent=1 // pred_region
      %24 = dma.done [#allocation3], 16384
    $region13: #{dt_layer_forward.1} parent=1 // pred_fallthru
      _
    %v25 = vld [vmem:[%s0] sm:$0x33]
    %v26 = vld [vmem:[%s0 + $0x8] sm:$0x33]
    %v29 = vcombine.high %v25, %v25
    %v30 = vcombine.high %v26, %v26
    %v33 = vpack.c.bf16 %v25, %v25
    %v34 = vpack.c.bf16 %v29, %v29
    %v35 = vpack.c.bf16 %v26, %v26
    %v36 = vpack.c.bf16 %v30, %v30
    %v37 = vld [vmem:[#allocation2] sm:$0xff]
    %v38 = vld [vmem:[#allocation2 + $0x8] sm:$0xff]
    %v39 = vld [vmem:[#allocation2 + $0x10] sm:$0xff]
    %v40 = vld [vmem:[#allocation2 + $0x18] sm:$0xff]
    %v41 = vld [vmem:[#allocation2 + $0x20] sm:$0xff]
    %v42 = vld [vmem:[#allocation2 + $0x28] sm:$0xff]
    %v43 = vld [vmem:[#allocation2 + $0x30] sm:$0xff]
    %v44 = vld [vmem:[#allocation2 + $0x38] sm:$0xff]
    %v45 = vld [vmem:[#allocation2 + $0x40] sm:$0xff]
    %v46 = vld [vmem:[#allocation2 + $0x48] sm:$0xff]
    %v47 = vld [vmem:[#allocation2 + $0x50] sm:$0xff]
    %v48 = vld [vmem:[#allocation2 + $0x58] sm:$0xff]
    %v49 = vld [vmem:[#allocation2 + $0x60] sm:$0xff]
    %v50 = vld [vmem:[#allocation2 + $0x68] sm:$0xff]
    %v51 = vld [vmem:[#allocation2 + $0x70] sm:$0xff]
    %v52 = vld [vmem:[#allocation2 + $0x78] sm:$0xff]
    %v53 = vld [vmem:[#allocation2 + $0x80] sm:$0xff]
    %v54 = vld [vmem:[#allocation2 + $0x88] sm:$0xff]
    %v55 = vld [vmem:[#allocation2 + $0x90] sm:$0xff]
    %v56 = vld [vmem:[#allocation2 + $0x98] sm:$0xff]
    %v57 = vld [vmem:[#allocation2 + $0xa0] sm:$0xff]
    %v58 = vld [vmem:[#allocation2 + $0xa8] sm:$0xff]
    %v59 = vld [vmem:[#allocation2 + $0xb0] sm:$0xff]
    %v60 = vld [vmem:[#allocation2 + $0xb8] sm:$0xff]
    %v61 = vld [vmem:[#allocation2 + $0xc0] sm:$0xff]
    %v62 = vld [vmem:[#allocation2 + $0xc8] sm:$0xff]
    %v63 = vld [vmem:[#allocation2 + $0xd0] sm:$0xff]
    %v64 = vld [vmem:[#allocation2 + $0xd8] sm:$0xff]
    %v65 = vld [vmem:[#allocation2 + $0xe0] sm:$0xff]
    %v66 = vld [vmem:[#allocation2 + $0xe8] sm:$0xff]
    %v67 = vld [vmem:[#allocation2 + $0xf0] sm:$0xff]
    %v68 = vld [vmem:[#allocation2 + $0xf8] sm:$0xff]
    %v69 = vld [vmem:[#allocation2 + $0x100] sm:$0xff]
    %v70 = vld [vmem:[#allocation2 + $0x108] sm:$0xff]
    %v71 = vld [vmem:[#allocation2 + $0x110] sm:$0xff]
    %v72 = vld [vmem:[#allocation2 + $0x118] sm:$0xff]
    %v73 = vld [vmem:[#allocation2 + $0x120] sm:$0xff]
    %v74 = vld [vmem:[#allocation2 + $0x128] sm:$0xff]
    %v75 = vld [vmem:[#allocation2 + $0x130] sm:$0xff]
    %v76 = vld [vmem:[#allocation2 + $0x138] sm:$0xff]
    %v77 = vld [vmem:[#allocation2 + $0x140] sm:$0xff]
    %v78 = vld [vmem:[#allocation2 + $0x148] sm:$0xff]
    %v79 = vld [vmem:[#allocation2 + $0x150] sm:$0xff]
    %v80 = vld [vmem:[#allocation2 + $0x158] sm:$0xff]
    %v81 = vld [vmem:[#allocation2 + $0x160] sm:$0xff]
    %v82 = vld [vmem:[#allocation2 + $0x168] sm:$0xff]
    %v83 = vld [vmem:[#allocation2 + $0x170] sm:$0xff]
    %v84 = vld [vmem:[#allocation2 + $0x178] sm:$0xff]
    %v85 = vld [vmem:[#allocation2 + $0x180] sm:$0xff]
    %v86 = vld [vmem:[#allocation2 + $0x188] sm:$0xff]
    %v87 = vld [vmem:[#allocation2 + $0x190] sm:$0xff]
    %v88 = vld [vmem:[#allocation2 + $0x198] sm:$0xff]
    %v89 = vld [vmem:[#allocation2 + $0x1a0] sm:$0xff]
    %v90 = vld [vmem:[#allocation2 + $0x1a8] sm:$0xff]
    %v91 = vld [vmem:[#allocation2 + $0x1b0] sm:$0xff]
    %v92 = vld [vmem:[#allocation2 + $0x1b8] sm:$0xff]
    %v93 = vld [vmem:[#allocation2 + $0x1c0] sm:$0xff]
    %v94 = vld [vmem:[#allocation2 + $0x1c8] sm:$0xff]
    %v95 = vld [vmem:[#allocation2 + $0x1d0] sm:$0xff]
    %v96 = vld [vmem:[#allocation2 + $0x1d8] sm:$0xff]
    %v97 = vld [vmem:[#allocation2 + $0x1e0] sm:$0xff]
    %v98 = vld [vmem:[#allocation2 + $0x1e8] sm:$0xff]
    %v99 = vld [vmem:[#allocation2 + $0x1f0] sm:$0xff]
    %v100 = vld [vmem:[#allocation2 + $0x1f8] sm:$0xff]
    %v101 = vld [vmem:[#allocation2 + $0x200] sm:$0xff]
    %v102 = vld [vmem:[#allocation2 + $0x208] sm:$0xff]
    %v103 = vld [vmem:[#allocation2 + $0x210] sm:$0xff]
    %v104 = vld [vmem:[#allocation2 + $0x218] sm:$0xff]
    %v105 = vld [vmem:[#allocation2 + $0x220] sm:$0xff]
    %v106 = vld [vmem:[#allocation2 + $0x228] sm:$0xff]
    %v107 = vld [vmem:[#allocation2 + $0x230] sm:$0xff]
    %v108 = vld [vmem:[#allocation2 + $0x238] sm:$0xff]
    %v109 = vld [vmem:[#allocation2 + $0x240] sm:$0xff]
    %v110 = vld [vmem:[#allocation2 + $0x248] sm:$0xff]
    %v111 = vld [vmem:[#allocation2 + $0x250] sm:$0xff]
    %v112 = vld [vmem:[#allocation2 + $0x258] sm:$0xff]
    %v113 = vld [vmem:[#allocation2 + $0x260] sm:$0xff]
    %v114 = vld [vmem:[#allocation2 + $0x268] sm:$0xff]
    %v115 = vld [vmem:[#allocation2 + $0x270] sm:$0xff]
    %v116 = vld [vmem:[#allocation2 + $0x278] sm:$0xff]
    %v117 = vld [vmem:[#allocation2 + $0x280] sm:$0xff]
    %v118 = vld [vmem:[#allocation2 + $0x288] sm:$0xff]
    %v119 = vld [vmem:[#allocation2 + $0x290] sm:$0xff]
    %v120 = vld [vmem:[#allocation2 + $0x298] sm:$0xff]
    %v121 = vld [vmem:[#allocation2 + $0x2a0] sm:$0xff]
    %v122 = vld [vmem:[#allocation2 + $0x2a8] sm:$0xff]
    %v123 = vld [vmem:[#allocation2 + $0x2b0] sm:$0xff]
    %v124 = vld [vmem:[#allocation2 + $0x2b8] sm:$0xff]
    %v125 = vld [vmem:[#allocation2 + $0x2c0] sm:$0xff]
    %v126 = vld [vmem:[#allocation2 + $0x2c8] sm:$0xff]
    %v127 = vld [vmem:[#allocation2 + $0x2d0] sm:$0xff]
    %v128 = vld [vmem:[#allocation2 + $0x2d8] sm:$0xff]
    %v129 = vld [vmem:[#allocation2 + $0x2e0] sm:$0xff]
    %v130 = vld [vmem:[#allocation2 + $0x2e8] sm:$0xff]
    %v131 = vld [vmem:[#allocation2 + $0x2f0] sm:$0xff]
    %v132 = vld [vmem:[#allocation2 + $0x2f8] sm:$0xff]
    %v133 = vld [vmem:[#allocation2 + $0x300] sm:$0xff]
    %v134 = vld [vmem:[#allocation2 + $0x308] sm:$0xff]
    %v135 = vld [vmem:[#allocation2 + $0x310] sm:$0xff]
    %v136 = vld [vmem:[#allocation2 + $0x318] sm:$0xff]
    %v137 = vld [vmem:[#allocation2 + $0x320] sm:$0xff]
    %v138 = vld [vmem:[#allocation2 + $0x328] sm:$0xff]
    %v139 = vld [vmem:[#allocation2 + $0x330] sm:$0xff]
    %v140 = vld [vmem:[#allocation2 + $0x338] sm:$0xff]
    %v141 = vld [vmem:[#allocation2 + $0x340] sm:$0xff]
    %v142 = vld [vmem:[#allocation2 + $0x348] sm:$0xff]
    %v143 = vld [vmem:[#allocation2 + $0x350] sm:$0xff]
    %v144 = vld [vmem:[#allocation2 + $0x358] sm:$0xff]
    %v145 = vld [vmem:[#allocation2 + $0x360] sm:$0xff]
    %v146 = vld [vmem:[#allocation2 + $0x368] sm:$0xff]
    %v147 = vld [vmem:[#allocation2 + $0x370] sm:$0xff]
    %v148 = vld [vmem:[#allocation2 + $0x378] sm:$0xff]
    %v149 = vld [vmem:[#allocation2 + $0x380] sm:$0xff]
    %v150 = vld [vmem:[#allocation2 + $0x388] sm:$0xff]
    %v151 = vld [vmem:[#allocation2 + $0x390] sm:$0xff]
    %v152 = vld [vmem:[#allocation2 + $0x398] sm:$0xff]
    %v153 = vld [vmem:[#allocation2 + $0x3a0] sm:$0xff]
    %v154 = vld [vmem:[#allocation2 + $0x3a8] sm:$0xff]
    %v155 = vld [vmem:[#allocation2 + $0x3b0] sm:$0xff]
    %v156 = vld [vmem:[#allocation2 + $0x3b8] sm:$0xff]
    %v157 = vld [vmem:[#allocation2 + $0x3c0] sm:$0xff]
    %v158 = vld [vmem:[#allocation2 + $0x3c8] sm:$0xff]
    %v159 = vld [vmem:[#allocation2 + $0x3d0] sm:$0xff]
    %v160 = vld [vmem:[#allocation2 + $0x3d8] sm:$0xff]
    %v161 = vld [vmem:[#allocation2 + $0x3e0] sm:$0xff]
    %v162 = vld [vmem:[#allocation2 + $0x3e8] sm:$0xff]
    %v163 = vld [vmem:[#allocation2 + $0x3f0] sm:$0xff]
    %v164 = vld [vmem:[#allocation2 + $0x3f8] sm:$0xff]
    %v293 = vunpack.c.l.b16 %v37
    %v294 = vunpack.c.h.b16 %v37
    %v295 = vunpack.c.l.b16 %v38
    %v296 = vunpack.c.h.b16 %v38
    %v297 = vunpack.c.l.b16 %v39
    %v298 = vunpack.c.h.b16 %v39
    %v299 = vunpack.c.l.b16 %v40
    %v300 = vunpack.c.h.b16 %v40
    %v301 = vunpack.c.l.b16 %v41
    %v302 = vunpack.c.h.b16 %v41
    %v303 = vunpack.c.l.b16 %v42
    %v304 = vunpack.c.h.b16 %v42
    %v305 = vunpack.c.l.b16 %v43
    %v306 = vunpack.c.h.b16 %v43
    %v307 = vunpack.c.l.b16 %v44
    %v308 = vunpack.c.h.b16 %v44
    %v309 = vunpack.c.l.b16 %v45
    %v310 = vunpack.c.h.b16 %v45
    %v311 = vunpack.c.l.b16 %v46
    %v312 = vunpack.c.h.b16 %v46
    %v313 = vunpack.c.l.b16 %v47
    %v314 = vunpack.c.h.b16 %v47
    %v315 = vunpack.c.l.b16 %v48
    %v316 = vunpack.c.h.b16 %v48
    %v317 = vunpack.c.l.b16 %v49
    %v318 = vunpack.c.h.b16 %v49
    %v319 = vunpack.c.l.b16 %v50
    %v320 = vunpack.c.h.b16 %v50
    %v321 = vunpack.c.l.b16 %v51
    %v322 = vunpack.c.h.b16 %v51
    %v323 = vunpack.c.l.b16 %v52
    %v324 = vunpack.c.h.b16 %v52
    %v325 = vunpack.c.l.b16 %v53
    %v326 = vunpack.c.h.b16 %v53
    %v327 = vunpack.c.l.b16 %v54
    %v328 = vunpack.c.h.b16 %v54
    %v329 = vunpack.c.l.b16 %v55
    %v330 = vunpack.c.h.b16 %v55
    %v331 = vunpack.c.l.b16 %v56
    %v332 = vunpack.c.h.b16 %v56
    %v333 = vunpack.c.l.b16 %v57
    %v334 = vunpack.c.h.b16 %v57
    %v335 = vunpack.c.l.b16 %v58
    %v336 = vunpack.c.h.b16 %v58
    %v337 = vunpack.c.l.b16 %v59
    %v338 = vunpack.c.h.b16 %v59
    %v339 = vunpack.c.l.b16 %v60
    %v340 = vunpack.c.h.b16 %v60
    %v341 = vunpack.c.l.b16 %v61
    %v342 = vunpack.c.h.b16 %v61
    %v343 = vunpack.c.l.b16 %v62
    %v344 = vunpack.c.h.b16 %v62
    %v345 = vunpack.c.l.b16 %v63
    %v346 = vunpack.c.h.b16 %v63
    %v347 = vunpack.c.l.b16 %v64
    %v348 = vunpack.c.h.b16 %v64
    %v349 = vunpack.c.l.b16 %v65
    %v350 = vunpack.c.h.b16 %v65
    %v351 = vunpack.c.l.b16 %v66
    %v352 = vunpack.c.h.b16 %v66
    %v353 = vunpack.c.l.b16 %v67
    %v354 = vunpack.c.h.b16 %v67
    %v355 = vunpack.c.l.b16 %v68
    %v356 = vunpack.c.h.b16 %v68
    %v357 = vunpack.c.l.b16 %v69
    %v358 = vunpack.c.h.b16 %v69
    %v359 = vunpack.c.l.b16 %v70
    %v360 = vunpack.c.h.b16 %v70
    %v361 = vunpack.c.l.b16 %v71
    %v362 = vunpack.c.h.b16 %v71
    %v363 = vunpack.c.l.b16 %v72
    %v364 = vunpack.c.h.b16 %v72
    %v365 = vunpack.c.l.b16 %v73
    %v366 = vunpack.c.h.b16 %v73
    %v367 = vunpack.c.l.b16 %v74
    %v368 = vunpack.c.h.b16 %v74
    %v369 = vunpack.c.l.b16 %v75
    %v370 = vunpack.c.h.b16 %v75
    %v371 = vunpack.c.l.b16 %v76
    %v372 = vunpack.c.h.b16 %v76
    %v373 = vunpack.c.l.b16 %v77
    %v374 = vunpack.c.h.b16 %v77
    %v375 = vunpack.c.l.b16 %v78
    %v376 = vunpack.c.h.b16 %v78
    %v377 = vunpack.c.l.b16 %v79
    %v378 = vunpack.c.h.b16 %v79
    %v379 = vunpack.c.l.b16 %v80
    %v380 = vunpack.c.h.b16 %v80
    %v381 = vunpack.c.l.b16 %v81
    %v382 = vunpack.c.h.b16 %v81
    %v383 = vunpack.c.l.b16 %v82
    %v384 = vunpack.c.h.b16 %v82
    %v385 = vunpack.c.l.b16 %v83
    %v386 = vunpack.c.h.b16 %v83
    %v387 = vunpack.c.l.b16 %v84
    %v388 = vunpack.c.h.b16 %v84
    %v389 = vunpack.c.l.b16 %v85
    %v390 = vunpack.c.h.b16 %v85
    %v391 = vunpack.c.l.b16 %v86
    %v392 = vunpack.c.h.b16 %v86
    %v393 = vunpack.c.l.b16 %v87
    %v394 = vunpack.c.h.b16 %v87
    %v395 = vunpack.c.l.b16 %v88
    %v396 = vunpack.c.h.b16 %v88
    %v397 = vunpack.c.l.b16 %v89
    %v398 = vunpack.c.h.b16 %v89
    %v399 = vunpack.c.l.b16 %v90
    %v400 = vunpack.c.h.b16 %v90
    %v401 = vunpack.c.l.b16 %v91
    %v402 = vunpack.c.h.b16 %v91
    %v403 = vunpack.c.l.b16 %v92
    %v404 = vunpack.c.h.b16 %v92
    %v405 = vunpack.c.l.b16 %v93
    %v406 = vunpack.c.h.b16 %v93
    %v407 = vunpack.c.l.b16 %v94
    %v408 = vunpack.c.h.b16 %v94
    %v409 = vunpack.c.l.b16 %v95
    %v410 = vunpack.c.h.b16 %v95
    %v411 = vunpack.c.l.b16 %v96
    %v412 = vunpack.c.h.b16 %v96
    %v413 = vunpack.c.l.b16 %v97
    %v414 = vunpack.c.h.b16 %v97
    %v415 = vunpack.c.l.b16 %v98
    %v416 = vunpack.c.h.b16 %v98
    %v417 = vunpack.c.l.b16 %v99
    %v418 = vunpack.c.h.b16 %v99
    %v419 = vunpack.c.l.b16 %v100
    %v420 = vunpack.c.h.b16 %v100
    %v421 = vunpack.c.l.b16 %v101
    %v422 = vunpack.c.h.b16 %v101
    %v423 = vunpack.c.l.b16 %v102
    %v424 = vunpack.c.h.b16 %v102
    %v425 = vunpack.c.l.b16 %v103
    %v426 = vunpack.c.h.b16 %v103
    %v427 = vunpack.c.l.b16 %v104
    %v428 = vunpack.c.h.b16 %v104
    %v429 = vunpack.c.l.b16 %v105
    %v430 = vunpack.c.h.b16 %v105
    %v431 = vunpack.c.l.b16 %v106
    %v432 = vunpack.c.h.b16 %v106
    %v433 = vunpack.c.l.b16 %v107
    %v434 = vunpack.c.h.b16 %v107
    %v435 = vunpack.c.l.b16 %v108
    %v436 = vunpack.c.h.b16 %v108
    %v437 = vunpack.c.l.b16 %v109
    %v438 = vunpack.c.h.b16 %v109
    %v439 = vunpack.c.l.b16 %v110
    %v440 = vunpack.c.h.b16 %v110
    %v441 = vunpack.c.l.b16 %v111
    %v442 = vunpack.c.h.b16 %v111
    %v443 = vunpack.c.l.b16 %v112
    %v444 = vunpack.c.h.b16 %v112
    %v445 = vunpack.c.l.b16 %v113
    %v446 = vunpack.c.h.b16 %v113
    %v447 = vunpack.c.l.b16 %v114
    %v448 = vunpack.c.h.b16 %v114
    %v449 = vunpack.c.l.b16 %v115
    %v450 = vunpack.c.h.b16 %v115
    %v451 = vunpack.c.l.b16 %v116
    %v452 = vunpack.c.h.b16 %v116
    %v453 = vunpack.c.l.b16 %v117
    %v454 = vunpack.c.h.b16 %v117
    %v455 = vunpack.c.l.b16 %v118
    %v456 = vunpack.c.h.b16 %v118
    %v457 = vunpack.c.l.b16 %v119
    %v458 = vunpack.c.h.b16 %v119
    %v459 = vunpack.c.l.b16 %v120
    %v460 = vunpack.c.h.b16 %v120
    %v461 = vunpack.c.l.b16 %v121
    %v462 = vunpack.c.h.b16 %v121
    %v463 = vunpack.c.l.b16 %v122
    %v464 = vunpack.c.h.b16 %v122
    %v465 = vunpack.c.l.b16 %v123
    %v466 = vunpack.c.h.b16 %v123
    %v467 = vunpack.c.l.b16 %v124
    %v468 = vunpack.c.h.b16 %v124
    %v469 = vunpack.c.l.b16 %v125
    %v470 = vunpack.c.h.b16 %v125
    %v471 = vunpack.c.l.b16 %v126
    %v472 = vunpack.c.h.b16 %v126
    %v473 = vunpack.c.l.b16 %v127
    %v474 = vunpack.c.h.b16 %v127
    %v475 = vunpack.c.l.b16 %v128
    %v476 = vunpack.c.h.b16 %v128
    %v477 = vunpack.c.l.b16 %v129
    %v478 = vunpack.c.h.b16 %v129
    %v479 = vunpack.c.l.b16 %v130
    %v480 = vunpack.c.h.b16 %v130
    %v481 = vunpack.c.l.b16 %v131
    %v482 = vunpack.c.h.b16 %v131
    %v483 = vunpack.c.l.b16 %v132
    %v484 = vunpack.c.h.b16 %v132
    %v485 = vunpack.c.l.b16 %v133
    %v486 = vunpack.c.h.b16 %v133
    %v487 = vunpack.c.l.b16 %v134
    %v488 = vunpack.c.h.b16 %v134
    %v489 = vunpack.c.l.b16 %v135
    %v490 = vunpack.c.h.b16 %v135
    %v491 = vunpack.c.l.b16 %v136
    %v492 = vunpack.c.h.b16 %v136
    %v493 = vunpack.c.l.b16 %v137
    %v494 = vunpack.c.h.b16 %v137
    %v495 = vunpack.c.l.b16 %v138
    %v496 = vunpack.c.h.b16 %v138
    %v497 = vunpack.c.l.b16 %v139
    %v498 = vunpack.c.h.b16 %v139
    %v499 = vunpack.c.l.b16 %v140
    %v500 = vunpack.c.h.b16 %v140
    %v501 = vunpack.c.l.b16 %v141
    %v502 = vunpack.c.h.b16 %v141
    %v503 = vunpack.c.l.b16 %v142
    %v504 = vunpack.c.h.b16 %v142
    %v505 = vunpack.c.l.b16 %v143
    %v506 = vunpack.c.h.b16 %v143
    %v507 = vunpack.c.l.b16 %v144
    %v508 = vunpack.c.h.b16 %v144
    %v509 = vunpack.c.l.b16 %v145
    %v510 = vunpack.c.h.b16 %v145
    %v511 = vunpack.c.l.b16 %v146
    %v512 = vunpack.c.h.b16 %v146
    %v513 = vunpack.c.l.b16 %v147
    %v514 = vunpack.c.h.b16 %v147
    %v515 = vunpack.c.l.b16 %v148
    %v516 = vunpack.c.h.b16 %v148
    %v517 = vunpack.c.l.b16 %v149
    %v518 = vunpack.c.h.b16 %v149
    %v519 = vunpack.c.l.b16 %v150
    %v520 = vunpack.c.h.b16 %v150
    %v521 = vunpack.c.l.b16 %v151
    %v522 = vunpack.c.h.b16 %v151
    %v523 = vunpack.c.l.b16 %v152
    %v524 = vunpack.c.h.b16 %v152
    %v525 = vunpack.c.l.b16 %v153
    %v526 = vunpack.c.h.b16 %v153
    %v527 = vunpack.c.l.b16 %v154
    %v528 = vunpack.c.h.b16 %v154
    %v529 = vunpack.c.l.b16 %v155
    %v530 = vunpack.c.h.b16 %v155
    %v531 = vunpack.c.l.b16 %v156
    %v532 = vunpack.c.h.b16 %v156
    %v533 = vunpack.c.l.b16 %v157
    %v534 = vunpack.c.h.b16 %v157
    %v535 = vunpack.c.l.b16 %v158
    %v536 = vunpack.c.h.b16 %v158
    %v537 = vunpack.c.l.b16 %v159
    %v538 = vunpack.c.h.b16 %v159
    %v539 = vunpack.c.l.b16 %v160
    %v540 = vunpack.c.h.b16 %v160
    %v541 = vunpack.c.l.b16 %v161
    %v542 = vunpack.c.h.b16 %v161
    %v543 = vunpack.c.l.b16 %v162
    %v544 = vunpack.c.h.b16 %v162
    %v545 = vunpack.c.l.b16 %v163
    %v546 = vunpack.c.h.b16 %v163
    %v547 = vunpack.c.l.b16 %v164
    %v548 = vunpack.c.h.b16 %v164
    %v549 = vpack.c.b16 %v297, %v293
    %v550 = vpack.c.b16 %v298, %v294
    %v551 = vpack.c.b16 %v299, %v295
    %v552 = vpack.c.b16 %v300, %v296
    %v553 = vpack.c.b16 %v305, %v301
    %v554 = vpack.c.b16 %v306, %v302
    %v555 = vpack.c.b16 %v307, %v303
    %v556 = vpack.c.b16 %v308, %v304
    %v557 = vpack.c.b16 %v313, %v309
    %v558 = vpack.c.b16 %v314, %v310
    %v559 = vpack.c.b16 %v315, %v311
    %v560 = vpack.c.b16 %v316, %v312
    %v561 = vpack.c.b16 %v321, %v317
    %v562 = vpack.c.b16 %v322, %v318
    %v563 = vpack.c.b16 %v323, %v319
    %v564 = vpack.c.b16 %v324, %v320
    %v565 = vpack.c.b16 %v329, %v325
    %v566 = vpack.c.b16 %v330, %v326
    %v567 = vpack.c.b16 %v331, %v327
    %v568 = vpack.c.b16 %v332, %v328
    %v569 = vpack.c.b16 %v337, %v333
    %v570 = vpack.c.b16 %v338, %v334
    %v571 = vpack.c.b16 %v339, %v335
    %v572 = vpack.c.b16 %v340, %v336
    %v573 = vpack.c.b16 %v345, %v341
    %v574 = vpack.c.b16 %v346, %v342
    %v575 = vpack.c.b16 %v347, %v343
    %v576 = vpack.c.b16 %v348, %v344
    %v577 = vpack.c.b16 %v353, %v349
    %v578 = vpack.c.b16 %v354, %v350
    %v579 = vpack.c.b16 %v355, %v351
    %v580 = vpack.c.b16 %v356, %v352
    %v581 = vpack.c.b16 %v361, %v357
    %v582 = vpack.c.b16 %v362, %v358
    %v583 = vpack.c.b16 %v363, %v359
    %v584 = vpack.c.b16 %v364, %v360
    %v585 = vpack.c.b16 %v369, %v365
    %v586 = vpack.c.b16 %v370, %v366
    %v587 = vpack.c.b16 %v371, %v367
    %v588 = vpack.c.b16 %v372, %v368
    %v589 = vpack.c.b16 %v377, %v373
    %v590 = vpack.c.b16 %v378, %v374
    %v591 = vpack.c.b16 %v379, %v375
    %v592 = vpack.c.b16 %v380, %v376
    %v593 = vpack.c.b16 %v385, %v381
    %v594 = vpack.c.b16 %v386, %v382
    %v595 = vpack.c.b16 %v387, %v383
    %v596 = vpack.c.b16 %v388, %v384
    %v597 = vpack.c.b16 %v393, %v389
    %v598 = vpack.c.b16 %v394, %v390
    %v599 = vpack.c.b16 %v395, %v391
    %v600 = vpack.c.b16 %v396, %v392
    %v601 = vpack.c.b16 %v401, %v397
    %v602 = vpack.c.b16 %v402, %v398
    %v603 = vpack.c.b16 %v403, %v399
    %v604 = vpack.c.b16 %v404, %v400
    %v605 = vpack.c.b16 %v409, %v405
    %v606 = vpack.c.b16 %v410, %v406
    %v607 = vpack.c.b16 %v411, %v407
    %v608 = vpack.c.b16 %v412, %v408
    %v609 = vpack.c.b16 %v417, %v413
    %v610 = vpack.c.b16 %v418, %v414
    %v611 = vpack.c.b16 %v419, %v415
    %v612 = vpack.c.b16 %v420, %v416
    %v613 = vpack.c.b16 %v425, %v421
    %v614 = vpack.c.b16 %v426, %v422
    %v615 = vpack.c.b16 %v427, %v423
    %v616 = vpack.c.b16 %v428, %v424
    %v617 = vpack.c.b16 %v433, %v429
    %v618 = vpack.c.b16 %v434, %v430
    %v619 = vpack.c.b16 %v435, %v431
    %v620 = vpack.c.b16 %v436, %v432
    %v621 = vpack.c.b16 %v441, %v437
    %v622 = vpack.c.b16 %v442, %v438
    %v623 = vpack.c.b16 %v443, %v439
    %v624 = vpack.c.b16 %v444, %v440
    %v625 = vpack.c.b16 %v449, %v445
    %v626 = vpack.c.b16 %v450, %v446
    %v627 = vpack.c.b16 %v451, %v447
    %v628 = vpack.c.b16 %v452, %v448
    %v629 = vpack.c.b16 %v457, %v453
    %v630 = vpack.c.b16 %v458, %v454
    %v631 = vpack.c.b16 %v459, %v455
    %v632 = vpack.c.b16 %v460, %v456
    %v633 = vpack.c.b16 %v465, %v461
    %v634 = vpack.c.b16 %v466, %v462
    %v635 = vpack.c.b16 %v467, %v463
    %v636 = vpack.c.b16 %v468, %v464
    %v637 = vpack.c.b16 %v473, %v469
    %v638 = vpack.c.b16 %v474, %v470
    %v639 = vpack.c.b16 %v475, %v471
    %v640 = vpack.c.b16 %v476, %v472
    %v641 = vpack.c.b16 %v481, %v477
    %v642 = vpack.c.b16 %v482, %v478
    %v643 = vpack.c.b16 %v483, %v479
    %v644 = vpack.c.b16 %v484, %v480
    %v645 = vpack.c.b16 %v489, %v485
    %v646 = vpack.c.b16 %v490, %v486
    %v647 = vpack.c.b16 %v491, %v487
    %v648 = vpack.c.b16 %v492, %v488
    %v649 = vpack.c.b16 %v497, %v493
    %v650 = vpack.c.b16 %v498, %v494
    %v651 = vpack.c.b16 %v499, %v495
    %v652 = vpack.c.b16 %v500, %v496
    %v653 = vpack.c.b16 %v505, %v501
    %v654 = vpack.c.b16 %v506, %v502
    %v655 = vpack.c.b16 %v507, %v503
    %v656 = vpack.c.b16 %v508, %v504
    %v657 = vpack.c.b16 %v513, %v509
    %v658 = vpack.c.b16 %v514, %v510
    %v659 = vpack.c.b16 %v515, %v511
    %v660 = vpack.c.b16 %v516, %v512
    %v661 = vpack.c.b16 %v521, %v517
    %v662 = vpack.c.b16 %v522, %v518
    %v663 = vpack.c.b16 %v523, %v519
    %v664 = vpack.c.b16 %v524, %v520
    %v665 = vpack.c.b16 %v529, %v525
    %v666 = vpack.c.b16 %v530, %v526
    %v667 = vpack.c.b16 %v531, %v527
    %v668 = vpack.c.b16 %v532, %v528
    %v669 = vpack.c.b16 %v537, %v533
    %v670 = vpack.c.b16 %v538, %v534
    %v671 = vpack.c.b16 %v539, %v535
    %v672 = vpack.c.b16 %v540, %v536
    %v673 = vpack.c.b16 %v545, %v541
    %v674 = vpack.c.b16 %v546, %v542
    %v675 = vpack.c.b16 %v547, %v543
    %v676 = vpack.c.b16 %v548, %v544
    %805 = vmatprep.subr.bf16.mxu0 %v550
    %806 = vmatpush1.bf16.msra.mxu0 %v549
    %807 = vmatprep.subr.bf16.mxu0 %v554
    %808 = vmatpush1.bf16.msra.mxu0 %v553
    %809 = vmatprep.subr.bf16.mxu0 %v558
    %810 = vmatpush1.bf16.msra.mxu0 %v557
    %811 = vmatprep.subr.bf16.mxu0 %v562
    %812 = vmatpush1.bf16.msra.mxu0 %v561
    %813 = vmatprep.subr.bf16.mxu0 %v566
    %814 = vmatpush1.bf16.msra.mxu0 %v565
    %815 = vmatprep.subr.bf16.mxu0 %v570
    %816 = vmatpush1.bf16.msra.mxu0 %v569
    %817 = vmatprep.subr.bf16.mxu0 %v574
    %818 = vmatpush1.bf16.msra.mxu0 %v573
    %819 = vmatprep.subr.bf16.mxu0 %v578
    %820 = vmatpush1.bf16.msra.mxu0 %v577
    %821 = vmatprep.subr.bf16.mxu0 %v582
    %822 = vmatpush1.bf16.msra.mxu0 %v581
    %823 = vmatprep.subr.bf16.mxu0 %v586
    %824 = vmatpush1.bf16.msra.mxu0 %v585
    %825 = vmatprep.subr.bf16.mxu0 %v590
    %826 = vmatpush1.bf16.msra.mxu0 %v589
    %827 = vmatprep.subr.bf16.mxu0 %v594
    %828 = vmatpush1.bf16.msra.mxu0 %v593
    %829 = vmatprep.subr.bf16.mxu0 %v598
    %830 = vmatpush1.bf16.msra.mxu0 %v597
    %831 = vmatprep.subr.bf16.mxu0 %v602
    %832 = vmatpush1.bf16.msra.mxu0 %v601
    %833 = vmatprep.subr.bf16.mxu0 %v606
    %834 = vmatpush1.bf16.msra.mxu0 %v605
    %835 = vmatprep.subr.bf16.mxu0 %v610
    %836 = vmatpush1.bf16.msra.mxu0 %v609
    %837 = vmatprep.mubr.bf16.mxu0 %v34
    %838 = vmatmul.mubr.bf16.gmra.mrb[0].mxu0 %v33
    %v839 = vpop.f32.mrb[0].mxu0
    %v840 = vadd.f32 0.0, %v839
    %v841 = vpop.f32.mrb[0].mxu0
    %v842 = vadd.f32 0.0, %v841
    %v843 = vpop.f32.mrb[0].mxu0
    %v844 = vpop.f32.mrb[0].mxu0
    %845 = vdwg.mxu0
    %846 = vmatprep.subr.bf16.mxu0 %v614
    %847 = vmatpush1.bf16.msra.mxu0 %v613
    %848 = vmatprep.subr.bf16.mxu0 %v618
    %849 = vmatpush1.bf16.msra.mxu0 %v617
    %850 = vmatprep.subr.bf16.mxu0 %v622
    %851 = vmatpush1.bf16.msra.mxu0 %v621
    %852 = vmatprep.subr.bf16.mxu0 %v626
    %853 = vmatpush1.bf16.msra.mxu0 %v625
    %854 = vmatprep.subr.bf16.mxu0 %v630
    %855 = vmatpush1.bf16.msra.mxu0 %v629
    %856 = vmatprep.subr.bf16.mxu0 %v634
    %857 = vmatpush1.bf16.msra.mxu0 %v633
    %858 = vmatprep.subr.bf16.mxu0 %v638
    %859 = vmatpush1.bf16.msra.mxu0 %v637
    %860 = vmatprep.subr.bf16.mxu0 %v642
    %861 = vmatpush1.bf16.msra.mxu0 %v641
    %862 = vmatprep.subr.bf16.mxu0 %v646
    %863 = vmatpush1.bf16.msra.mxu0 %v645
    %864 = vmatprep.subr.bf16.mxu0 %v650
    %865 = vmatpush1.bf16.msra.mxu0 %v649
    %866 = vmatprep.subr.bf16.mxu0 %v654
    %867 = vmatpush1.bf16.msra.mxu0 %v653
    %868 = vmatprep.subr.bf16.mxu0 %v658
    %869 = vmatpush1.bf16.msra.mxu0 %v657
    %870 = vmatprep.subr.bf16.mxu0 %v662
    %871 = vmatpush1.bf16.msra.mxu0 %v661
    %872 = vmatprep.subr.bf16.mxu0 %v666
    %873 = vmatpush1.bf16.msra.mxu0 %v665
    %874 = vmatprep.subr.bf16.mxu0 %v670
    %875 = vmatpush1.bf16.msra.mxu0 %v669
    %876 = vmatprep.subr.bf16.mxu0 %v674
    %877 = vmatpush1.bf16.msra.mxu0 %v673
    %878 = vmatprep.mubr.bf16.mxu0 %v36
    %879 = vmatmul.mubr.bf16.gmra.mrb[0].mxu0 %v35
    %v880 = vpop.f32.mrb[0].mxu0
    %v881 = vadd.f32 %v840, %v880
    %v882 = vpop.f32.mrb[0].mxu0
    %v883 = vadd.f32 %v842, %v882
    %v884 = vpop.f32.mrb[0].mxu0
    %v885 = vpop.f32.mrb[0].mxu0
    %886 = vdwg.mxu0
    %887 = vmatprep.subr.bf16.mxu0 %v552
    %888 = vmatpush1.bf16.msra.mxu0 %v551
    %889 = vmatprep.subr.bf16.mxu0 %v556
    %890 = vmatpush1.bf16.msra.mxu0 %v555
    %891 = vmatprep.subr.bf16.mxu0 %v560
    %892 = vmatpush1.bf16.msra.mxu0 %v559
    %893 = vmatprep.subr.bf16.mxu0 %v564
    %894 = vmatpush1.bf16.msra.mxu0 %v563
    %895 = vmatprep.subr.bf16.mxu0 %v568
    %896 = vmatpush1.bf16.msra.mxu0 %v567
    %897 = vmatprep.subr.bf16.mxu0 %v572
    %898 = vmatpush1.bf16.msra.mxu0 %v571
    %899 = vmatprep.subr.bf16.mxu0 %v576
    %900 = vmatpush1.bf16.msra.mxu0 %v575
    %901 = vmatprep.subr.bf16.mxu0 %v580
    %902 = vmatpush1.bf16.msra.mxu0 %v579
    %903 = vmatprep.subr.bf16.mxu0 %v584
    %904 = vmatpush1.bf16.msra.mxu0 %v583
    %905 = vmatprep.subr.bf16.mxu0 %v588
    %906 = vmatpush1.bf16.msra.mxu0 %v587
    %907 = vmatprep.subr.bf16.mxu0 %v592
    %908 = vmatpush1.bf16.msra.mxu0 %v591
    %909 = vmatprep.subr.bf16.mxu0 %v596
    %910 = vmatpush1.bf16.msra.mxu0 %v595
    %911 = vmatprep.subr.bf16.mxu0 %v600
    %912 = vmatpush1.bf16.msra.mxu0 %v599
    %913 = vmatprep.subr.bf16.mxu0 %v604
    %914 = vmatpush1.bf16.msra.mxu0 %v603
    %915 = vmatprep.subr.bf16.mxu0 %v608
    %916 = vmatpush1.bf16.msra.mxu0 %v607
    %917 = vmatprep.subr.bf16.mxu0 %v612
    %918 = vmatpush1.bf16.msra.mxu0 %v611
    %919 = vmatprep.mubr.bf16.mxu0 %v34
    %920 = vmatmul.mubr.bf16.gmra.mrb[0].mxu0 %v33
    %v921 = vpop.f32.mrb[0].mxu0
    %v922 = vadd.f32 0.0, %v921
    %v923 = vpop.f32.mrb[0].mxu0
    %v924 = vadd.f32 0.0, %v923
    %v925 = vpop.f32.mrb[0].mxu0
    %v926 = vpop.f32.mrb[0].mxu0
    %927 = vdwg.mxu0
    %928 = vmatprep.subr.bf16.mxu0 %v616
    %929 = vmatpush1.bf16.msra.mxu0 %v615
    %930 = vmatprep.subr.bf16.mxu0 %v620
    %931 = vmatpush1.bf16.msra.mxu0 %v619
    %932 = vmatprep.subr.bf16.mxu0 %v624
    %933 = vmatpush1.bf16.msra.mxu0 %v623
    %934 = vmatprep.subr.bf16.mxu0 %v628
    %935 = vmatpush1.bf16.msra.mxu0 %v627
    %936 = vmatprep.subr.bf16.mxu0 %v632
    %937 = vmatpush1.bf16.msra.mxu0 %v631
    %938 = vmatprep.subr.bf16.mxu0 %v636
    %939 = vmatpush1.bf16.msra.mxu0 %v635
    %940 = vmatprep.subr.bf16.mxu0 %v640
    %941 = vmatpush1.bf16.msra.mxu0 %v639
    %942 = vmatprep.subr.bf16.mxu0 %v644
    %943 = vmatpush1.bf16.msra.mxu0 %v643
    %944 = vmatprep.subr.bf16.mxu0 %v648
    %945 = vmatpush1.bf16.msra.mxu0 %v647
    %946 = vmatprep.subr.bf16.mxu0 %v652
    %947 = vmatpush1.bf16.msra.mxu0 %v651
    %948 = vmatprep.subr.bf16.mxu0 %v656
    %949 = vmatpush1.bf16.msra.mxu0 %v655
    %950 = vmatprep.subr.bf16.mxu0 %v660
    %951 = vmatpush1.bf16.msra.mxu0 %v659
    %952 = vmatprep.subr.bf16.mxu0 %v664
    %953 = vmatpush1.bf16.msra.mxu0 %v663
    %954 = vmatprep.subr.bf16.mxu0 %v668
    %955 = vmatpush1.bf16.msra.mxu0 %v667
    %956 = vmatprep.subr.bf16.mxu0 %v672
    %957 = vmatpush1.bf16.msra.mxu0 %v671
    %958 = vmatprep.subr.bf16.mxu0 %v676
    %959 = vmatpush1.bf16.msra.mxu0 %v675
    %960 = vmatprep.mubr.bf16.mxu0 %v36
    %961 = vmatmul.mubr.bf16.gmra.mrb[0].mxu0 %v35
    %v962 = vpop.f32.mrb[0].mxu0
    %v963 = vadd.f32 %v922, %v962
    %v964 = vpop.f32.mrb[0].mxu0
    %v965 = vadd.f32 %v924, %v964
    %v966 = vpop.f32.mrb[0].mxu0
    %v967 = vpop.f32.mrb[0].mxu0
    %968 = vdwg.mxu0
    %s969 = scalar_lea.vmem %s0, 2
    %v970 = vld [vmem:[%s969] ss:$4 sm:$0x3]
    %s971 = scalar_lea.vmem %s0, 10
    %v972 = vld [vmem:[%s971] ss:$4 sm:$0x3]
    %s973 = scalar_lea.vmem %s0, 3
    %v974 = vld [vmem:[%s973] ss:$4 sm:$0x3]
    %v976 = vlaneseq
    %v977 = vshrl.u32 %v976, 7
    %v978 = vsub.s32 0, %v977
    %v979 = vrot.slane %v974, %v978
    %v980 = vlaneseq
    %v981 = vshrl.u32 %v980, 7
    %v982 = vsub.s32 1, %v981
    %v983 = vrot.slane %v974, %v982
    %vm986 = vcmask 1040384
    %v987 = vsel %vm986, %v979, inf
    %v988 = vsel %vm986, %v983, inf
    %v989 = vmin.f32 %v987, %v988
    %990 = vmin.xlane.f32.xlu0 %v989
    %v991 = vpop.xlane.xlu0 %990
    %v992 = vrot.slane %v991, 4
    %v993 = vmin.f32 %v991, %v992
    %v994 = vrot.slane %v993, 2
    %v995 = vmin.f32 %v993, %v994
    %v996 = vrot.slane %v995, 1
    %v997 = vmin.f32 %v995, %v996
    %s998 = vtos %v997
    %v999 = vstv %s998
    %v1000 = vsel %vm986, %v979, -inf
    %v1001 = vsel %vm986, %v983, -inf
    %v1002 = vmax.f32 %v1000, %v1001
    %1003 = vmax.xlane.f32.xlu0 %v1002
    %v1004 = vpop.xlane.xlu0 %1003
    %v1005 = vrot.slane %v1004, 4
    %v1006 = vmax.f32 %v1004, %v1005
    %v1007 = vrot.slane %v1006, 2
    %v1008 = vmax.f32 %v1006, %v1007
    %v1009 = vrot.slane %v1008, 1
    %v1010 = vmax.f32 %v1008, %v1009
    %s1011 = vtos %v1010
    %v1012 = vstv %s1011
    %v1013 = vsub.f32 %v1012, %v999
    %v1014 = vrcp.pop 255.0
    %v1015 = vmul.f32 %v1013, %v1014
    %v1016 = vmax.f32 %v1015, 1e-12
    %v1017 = vrcp.pop %v1016
    %v1018 = vmul.f32 1.0, %v1017
    %v1019 = vmul.f32 %v999, %v1018
    %v1020 = vsub.f32 0.0, %v1019
    %v1021 = vround.ne.pseudo %v1020
    %v1022 = vmax.f32 %v1021, 0.0
    %v1023 = vmin.f32 %v1022, 255.0
    %v1024 = vmul.f32 %v974, %v1018
    %v1025 = vadd.f32 %v1023, %v1024
    %v1026 = vround.ne.pseudo %v1025
    %v1027 = vmax.f32 %v1026, 0.0
    %v1028 = vmin.f32 %v1027, 255.0
    %v1029 = vsub.f32 %v1028, %v1023
    %v1030 = vmul.f32 %v1016, %v1029
    %v1031 = vmul.f32 %v1030, 0.5
    %v1032 = vand.u32 2147483647, %v1031
    %vm1033 = vcmp.le.f32.partialorder %v1032, 0.7853982
    %vm1034 = vcmp.lt.s32.totalorder %v1031, 0
    %v1035 = vand.u32 %v1031, 2139095040
    %v1036 = vshrl.u32 %v1035, 23
    %v1037 = vsub.s32 %v1036, 127
    %v1038 = vand.u32 2147483647, %v1031
    %v1039 = vand.u32 %v1038, 8388607
    %v1040 = vor.u32 %v1039, 8388608
    %v1041 = vsub.s32 0, %v1040
    %v1042 = vadd.s32 %v1037, 1
    %vm1043 = vcmp.gt.s32.totalorder %v1042, 0
    %v1044 = vsel %vm1043, %v1042, 0
    %v1045 = vshrl.u32 %v1044, 5
    %v1046 = vand.u32 %v1044, 31
    %v1047 = vsub.s32 32, %v1046
    %v1048 = vshrl.u32 683565275, %v1047
    %v1049 = vshll.u32 683565275, %v1046
    %v1050 = vshrl.u32 2475754826, %v1047
    %v1051 = vor.u32 %v1049, %v1050
    %v1052 = vshll.u32 2475754826, %v1046
    %v1053 = vshrl.u32 2131351028, %v1047
    %v1054 = vor.u32 %v1052, %v1053
    %v1055 = vshll.u32 2131351028, %v1046
    %v1056 = vshrl.u32 2102212464, %v1047
    %v1057 = vor.u32 %v1055, %v1056
    %v1058 = vshll.u32 2102212464, %v1046
    %v1059 = vshrl.u32 920167782, %v1047
    %v1060 = vor.u32 %v1058, %v1059
    %v1061 = vshll.u32 920167782, %v1046
    %v1062 = vshrl.u32 1326507024, %v1047
    %v1063 = vor.u32 %v1061, %v1062
    %vm1064 = vcmp.lt.s32.totalorder %v1045, 1
    %vm1065 = vcmp.lt.s32.totalorder %v1045, 2
    %vm1066 = vcmp.lt.s32.totalorder %v1045, 3
    %vm1067 = vcmp.lt.s32.totalorder %v1045, 4
    %v1068 = vsel %vm1064, %v1048, %v1051
    %v1069 = vsel %vm1067, %v1057, 2102212464
    %v1070 = vsel %vm1066, %v1054, %v1069
    %v1071 = vsel %vm1065, %v1068, %v1070
    %v1072 = vsel %vm1064, %v1051, %v1054
    %v1073 = vsel %vm1067, %v1060, 920167782
    %v1074 = vsel %vm1066, %v1057, %v1073
    %v1075 = vsel %vm1065, %v1072, %v1074
    %v1076 = vsel %vm1064, %v1054, %v1057
    %v1077 = vsel %vm1067, %v1063, 1326507024
    %v1078 = vsel %vm1066, %v1060, %v1077
    %v1079 = vsel %vm1065, %v1076, %v1078
    %v1080 = vshll.u32 %v1040, 8
    %v1081 = vmul.u32.u64.compose %v1080, %v1079
    %v1082 = vextract.low.u32 %v1081
    %v1083 = vextract.high.u32 %v1081
    %v1084 = vmul.u32.u64.compose %v1080, %v1075
    %v1085 = vextract.low.u32 %v1084
    %v1086 = vextract.high.u32 %v1084
    %v1087 = vmul.u32 %v1080, %v1071
    %v1088 = vadd.s32 %v1083, %v1085
    %vm1089 = vc.u32 %v1083, %v1085
    %v1090 = vadd.s32 %v1086, 1
    %v1091 = vsel %vm1089, %v1090, %v1086
    %v1092 = vadd.s32 %v1087, %v1091
    %v1093 = vadd.s32 %v1092, 536870912
    %v1094 = vshrl.u32 %v1093, 30
    %v1095 = vshll.u32 %v1094, 30
    %v1096 = vsub.s32 %v1092, %v1095
    %vm1097 = vcmp.lt.s32.totalorder %v1096, 0
    %v1098 = vsub.s32 0, %v1096
    %v1099 = vsel %vm1097, %v1098, %v1096
    %v1100 = vclz %v1099
    %v1101 = vsub.s32 %v1100, 2
    %vm1102 = vcmp.gt.s32.totalorder 0, %v1101
    %v1103 = vsel %vm1102, 0, %v1101
    %v1104 = vsub.s32 32, %v1103
    %v1105 = vshll.u32 %v1096, %v1103
    %v1106 = vshrl.u32 %v1088, %v1104
    %v1107 = vor.u32 %v1105, %v1106
    %v1108 = vsub.s32 4294967266, %v1103
    %v1109 = vadd.s32 %v1108, 127
    %v1110 = vshll.u32 %v1109, 23
    %v1111 = vor.u32 4788187, %v1110
    %v1112 = vand.u32 2147483647, %v1111
    %v1114 = vcvt.s32.f32 %v1107
    %v1115 = vmul.f32 %v1114, %v1112
    %v1116 = vxor.u32 %v1115, 2147483648
    %v1117 = vsel %vm1034, %v1116, %v1115
    %v1118 = vsub.s32 4, %v1094
    %v1119 = vsel %vm1034, %v1118, %v1094
    %v1120 = vsel %vm1033, %v1031, %v1117
    %v1121 = vsel %vm1033, 0, %v1119
    %v1122 = vcosq.f32.pop %v1120
    %v1123 = vsinq.f32.pop %v1120
    %vm1124 = vweird.f32 %v1031
    %v1125 = vand.u32 %v1121, 3
    %vm1126 = vcmp.lt.s32.totalorder %v1125, 2
    %vm1127 = vcmp.eq.s32.totalorder %v1125, 0
    %v1128 = vxor.u32 %v1123, 2147483648
    %v1129 = vsel %vm1127, %v1122, %v1128
    %vm1130 = vcmp.eq.s32.totalorder %v1125, 2
    %v1131 = vxor.u32 %v1122, 2147483648
    %v1132 = vsel %vm1130, %v1131, %v1123
    %v1133 = vsel %vm1126, %v1129, %v1132
    %v1134 = vsel %vm1124, nan, %v1133
    %v1135 = vand.u32 2147483647, %v1031
    %vm1136 = vcmp.le.f32.partialorder %v1135, 0.7853982
    %vm1137 = vcmp.lt.s32.totalorder %v1031, 0
    %v1138 = vand.u32 %v1031, 2139095040
    %v1139 = vshrl.u32 %v1138, 23
    %v1140 = vsub.s32 %v1139, 127
    %v1141 = vand.u32 2147483647, %v1031
    %v1142 = vand.u32 %v1141, 8388607
    %v1143 = vor.u32 %v1142, 8388608
    %v1144 = vsub.s32 0, %v1143
    %v1145 = vadd.s32 %v1140, 1
    %vm1146 = vcmp.gt.s32.totalorder %v1145, 0
    %v1147 = vsel %vm1146, %v1145, 0
    %v1148 = vshrl.u32 %v1147, 5
    %v1149 = vand.u32 %v1147, 31
    %v1150 = vsub.s32 32, %v1149
    %v1151 = vshrl.u32 683565275, %v1150
    %v1152 = vshll.u32 683565275, %v1149
    %v1153 = vshrl.u32 2475754826, %v1150
    %v1154 = vor.u32 %v1152, %v1153
    %v1155 = vshll.u32 2475754826, %v1149
    %v1156 = vshrl.u32 2131351028, %v1150
    %v1157 = vor.u32 %v1155, %v1156
    %v1158 = vshll.u32 2131351028, %v1149
    %v1159 = vshrl.u32 2102212464, %v1150
    %v1160 = vor.u32 %v1158, %v1159
    %v1161 = vshll.u32 2102212464, %v1149
    %v1162 = vshrl.u32 920167782, %v1150
    %v1163 = vor.u32 %v1161, %v1162
    %v1164 = vshll.u32 920167782, %v1149
    %v1165 = vshrl.u32 1326507024, %v1150
    %v1166 = vor.u32 %v1164, %v1165
    %vm1167 = vcmp.lt.s32.totalorder %v1148, 1
    %vm1168 = vcmp.lt.s32.totalorder %v1148, 2
    %vm1169 = vcmp.lt.s32.totalorder %v1148, 3
    %vm1170 = vcmp.lt.s32.totalorder %v1148, 4
    %v1171 = vsel %vm1167, %v1151, %v1154
    %v1172 = vsel %vm1170, %v1160, 2102212464
    %v1173 = vsel %vm1169, %v1157, %v1172
    %v1174 = vsel %vm1168, %v1171, %v1173
    %v1175 = vsel %vm1167, %v1154, %v1157
    %v1176 = vsel %vm1170, %v1163, 920167782
    %v1177 = vsel %vm1169, %v1160, %v1176
    %v1178 = vsel %vm1168, %v1175, %v1177
    %v1179 = vsel %vm1167, %v1157, %v1160
    %v1180 = vsel %vm1170, %v1166, 1326507024
    %v1181 = vsel %vm1169, %v1163, %v1180
    %v1182 = vsel %vm1168, %v1179, %v1181
    %v1183 = vshll.u32 %v1143, 8
    %v1184 = vmul.u32.u64.compose %v1183, %v1182
    %v1185 = vextract.low.u32 %v1184
    %v1186 = vextract.high.u32 %v1184
    %v1187 = vmul.u32.u64.compose %v1183, %v1178
    %v1188 = vextract.low.u32 %v1187
    %v1189 = vextract.high.u32 %v1187
    %v1190 = vmul.u32 %v1183, %v1174
    %v1191 = vadd.s32 %v1186, %v1188
    %vm1192 = vc.u32 %v1186, %v1188
    %v1193 = vadd.s32 %v1189, 1
    %v1194 = vsel %vm1192, %v1193, %v1189
    %v1195 = vadd.s32 %v1190, %v1194
    %v1196 = vadd.s32 %v1195, 536870912
    %v1197 = vshrl.u32 %v1196, 30
    %v1198 = vshll.u32 %v1197, 30
    %v1199 = vsub.s32 %v1195, %v1198
    %vm1200 = vcmp.lt.s32.totalorder %v1199, 0
    %v1201 = vsub.s32 0, %v1199
    %v1202 = vsel %vm1200, %v1201, %v1199
    %v1203 = vclz %v1202
    %v1204 = vsub.s32 %v1203, 2
    %vm1205 = vcmp.gt.s32.totalorder 0, %v1204
    %v1206 = vsel %vm1205, 0, %v1204
    %v1207 = vsub.s32 32, %v1206
    %v1208 = vshll.u32 %v1199, %v1206
    %v1209 = vshrl.u32 %v1191, %v1207
    %v1210 = vor.u32 %v1208, %v1209
    %v1211 = vsub.s32 4294967266, %v1206
    %v1212 = vadd.s32 %v1211, 127
    %v1213 = vshll.u32 %v1212, 23
    %v1214 = vor.u32 4788187, %v1213
    %v1215 = vand.u32 2147483647, %v1214
    %v1217 = vcvt.s32.f32 %v1210
    %v1218 = vmul.f32 %v1217, %v1215
    %v1219 = vxor.u32 %v1218, 2147483648
    %v1220 = vsel %vm1137, %v1219, %v1218
    %v1221 = vsub.s32 4, %v1197
    %v1222 = vsel %vm1137, %v1221, %v1197
    %v1223 = vsel %vm1136, %v1031, %v1220
    %v1224 = vsel %vm1136, 0, %v1222
    %v1225 = vcosq.f32.pop %v1223
    %v1226 = vsinq.f32.pop %v1223
    %vm1227 = vweird.f32 %v1031
    %v1228 = vadd.s32 %v1224, 3
    %v1229 = vand.u32 %v1228, 3
    %vm1230 = vcmp.lt.s32.totalorder %v1229, 2
    %vm1231 = vcmp.eq.s32.totalorder %v1229, 0
    %v1232 = vxor.u32 %v1226, 2147483648
    %v1233 = vsel %vm1231, %v1225, %v1232
    %vm1234 = vcmp.eq.s32.totalorder %v1229, 2
    %v1235 = vxor.u32 %v1225, 2147483648
    %v1236 = vsel %vm1234, %v1235, %v1226
    %v1237 = vsel %vm1230, %v1233, %v1236
    %v1238 = vsel %vm1227, nan, %v1237
    %v1239 = vand.u32 2147483647, %v970
    %vm1240 = vcmp.le.f32.partialorder %v1239, 0.7853982
    %vm1241 = vcmp.lt.s32.totalorder %v970, 0
    %v1242 = vand.u32 %v970, 2139095040
    %v1243 = vshrl.u32 %v1242, 23
    %v1244 = vsub.s32 %v1243, 127
    %v1245 = vand.u32 2147483647, %v970
    %v1246 = vand.u32 %v1245, 8388607
    %v1247 = vor.u32 %v1246, 8388608
    %v1248 = vsub.s32 0, %v1247
    %v1249 = vadd.s32 %v1244, 1
    %vm1250 = vcmp.gt.s32.totalorder %v1249, 0
    %v1251 = vsel %vm1250, %v1249, 0
    %v1252 = vshrl.u32 %v1251, 5
    %v1253 = vand.u32 %v1251, 31
    %v1254 = vsub.s32 32, %v1253
    %v1255 = vshrl.u32 683565275, %v1254
    %v1256 = vshll.u32 683565275, %v1253
    %v1257 = vshrl.u32 2475754826, %v1254
    %v1258 = vor.u32 %v1256, %v1257
    %v1259 = vshll.u32 2475754826, %v1253
    %v1260 = vshrl.u32 2131351028, %v1254
    %v1261 = vor.u32 %v1259, %v1260
    %v1262 = vshll.u32 2131351028, %v1253
    %v1263 = vshrl.u32 2102212464, %v1254
    %v1264 = vor.u32 %v1262, %v1263
    %v1265 = vshll.u32 2102212464, %v1253
    %v1266 = vshrl.u32 920167782, %v1254
    %v1267 = vor.u32 %v1265, %v1266
    %v1268 = vshll.u32 920167782, %v1253
    %v1269 = vshrl.u32 1326507024, %v1254
    %v1270 = vor.u32 %v1268, %v1269
    %vm1271 = vcmp.lt.s32.totalorder %v1252, 1
    %vm1272 = vcmp.lt.s32.totalorder %v1252, 2
    %vm1273 = vcmp.lt.s32.totalorder %v1252, 3
    %vm1274 = vcmp.lt.s32.totalorder %v1252, 4
    %v1275 = vsel %vm1271, %v1255, %v1258
    %v1276 = vsel %vm1274, %v1264, 2102212464
    %v1277 = vsel %vm1273, %v1261, %v1276
    %v1278 = vsel %vm1272, %v1275, %v1277
    %v1279 = vsel %vm1271, %v1258, %v1261
    %v1280 = vsel %vm1274, %v1267, 920167782
    %v1281 = vsel %vm1273, %v1264, %v1280
    %v1282 = vsel %vm1272, %v1279, %v1281
    %v1283 = vsel %vm1271, %v1261, %v1264
    %v1284 = vsel %vm1274, %v1270, 1326507024
    %v1285 = vsel %vm1273, %v1267, %v1284
    %v1286 = vsel %vm1272, %v1283, %v1285
    %v1287 = vshll.u32 %v1247, 8
    %v1288 = vmul.u32.u64.compose %v1287, %v1286
    %v1289 = vextract.low.u32 %v1288
    %v1290 = vextract.high.u32 %v1288
    %v1291 = vmul.u32.u64.compose %v1287, %v1282
    %v1292 = vextract.low.u32 %v1291
    %v1293 = vextract.high.u32 %v1291
    %v1294 = vmul.u32 %v1287, %v1278
    %v1295 = vadd.s32 %v1290, %v1292
    %vm1296 = vc.u32 %v1290, %v1292
    %v1297 = vadd.s32 %v1293, 1
    %v1298 = vsel %vm1296, %v1297, %v1293
    %v1299 = vadd.s32 %v1294, %v1298
    %v1300 = vadd.s32 %v1299, 536870912
    %v1301 = vshrl.u32 %v1300, 30
    %v1302 = vshll.u32 %v1301, 30
    %v1303 = vsub.s32 %v1299, %v1302
    %vm1304 = vcmp.lt.s32.totalorder %v1303, 0
    %v1305 = vsub.s32 0, %v1303
    %v1306 = vsel %vm1304, %v1305, %v1303
    %v1307 = vclz %v1306
    %v1308 = vsub.s32 %v1307, 2
    %vm1309 = vcmp.gt.s32.totalorder 0, %v1308
    %v1310 = vsel %vm1309, 0, %v1308
    %v1311 = vsub.s32 32, %v1310
    %v1312 = vshll.u32 %v1303, %v1310
    %v1313 = vshrl.u32 %v1295, %v1311
    %v1314 = vor.u32 %v1312, %v1313
    %v1315 = vsub.s32 4294967266, %v1310
    %v1316 = vadd.s32 %v1315, 127
    %v1317 = vshll.u32 %v1316, 23
    %v1318 = vor.u32 4788187, %v1317
    %v1319 = vand.u32 2147483647, %v1318
    %v1321 = vcvt.s32.f32 %v1314
    %v1322 = vmul.f32 %v1321, %v1319
    %v1323 = vxor.u32 %v1322, 2147483648
    %v1324 = vsel %vm1241, %v1323, %v1322
    %v1325 = vsub.s32 4, %v1301
    %v1326 = vsel %vm1241, %v1325, %v1301
    %v1327 = vsel %vm1240, %v970, %v1324
    %v1328 = vsel %vm1240, 0, %v1326
    %v1329 = vcosq.f32.pop %v1327
    %v1330 = vsinq.f32.pop %v1327
    %vm1331 = vweird.f32 %v970
    %v1332 = vand.u32 %v1328, 3
    %vm1333 = vcmp.lt.s32.totalorder %v1332, 2
    %vm1334 = vcmp.eq.s32.totalorder %v1332, 0
    %v1335 = vxor.u32 %v1330, 2147483648
    %v1336 = vsel %vm1334, %v1329, %v1335
    %vm1337 = vcmp.eq.s32.totalorder %v1332, 2
    %v1338 = vxor.u32 %v1329, 2147483648
    %v1339 = vsel %vm1337, %v1338, %v1330
    %v1340 = vsel %vm1333, %v1336, %v1339
    %v1341 = vsel %vm1331, nan, %v1340
    %v1342 = vand.u32 2147483647, %v970
    %vm1343 = vcmp.le.f32.partialorder %v1342, 0.7853982
    %vm1344 = vcmp.lt.s32.totalorder %v970, 0
    %v1345 = vand.u32 %v970, 2139095040
    %v1346 = vshrl.u32 %v1345, 23
    %v1347 = vsub.s32 %v1346, 127
    %v1348 = vand.u32 2147483647, %v970
    %v1349 = vand.u32 %v1348, 8388607
    %v1350 = vor.u32 %v1349, 8388608
    %v1351 = vsub.s32 0, %v1350
    %v1352 = vadd.s32 %v1347, 1
    %vm1353 = vcmp.gt.s32.totalorder %v1352, 0
    %v1354 = vsel %vm1353, %v1352, 0
    %v1355 = vshrl.u32 %v1354, 5
    %v1356 = vand.u32 %v1354, 31
    %v1357 = vsub.s32 32, %v1356
    %v1358 = vshrl.u32 683565275, %v1357
    %v1359 = vshll.u32 683565275, %v1356
    %v1360 = vshrl.u32 2475754826, %v1357
    %v1361 = vor.u32 %v1359, %v1360
    %v1362 = vshll.u32 2475754826, %v1356
    %v1363 = vshrl.u32 2131351028, %v1357
    %v1364 = vor.u32 %v1362, %v1363
    %v1365 = vshll.u32 2131351028, %v1356
    %v1366 = vshrl.u32 2102212464, %v1357
    %v1367 = vor.u32 %v1365, %v1366
    %v1368 = vshll.u32 2102212464, %v1356
    %v1369 = vshrl.u32 920167782, %v1357
    %v1370 = vor.u32 %v1368, %v1369
    %v1371 = vshll.u32 920167782, %v1356
    %v1372 = vshrl.u32 1326507024, %v1357
    %v1373 = vor.u32 %v1371, %v1372
    %vm1374 = vcmp.lt.s32.totalorder %v1355, 1
    %vm1375 = vcmp.lt.s32.totalorder %v1355, 2
    %vm1376 = vcmp.lt.s32.totalorder %v1355, 3
    %vm1377 = vcmp.lt.s32.totalorder %v1355, 4
    %v1378 = vsel %vm1374, %v1358, %v1361
    %v1379 = vsel %vm1377, %v1367, 2102212464
    %v1380 = vsel %vm1376, %v1364, %v1379
    %v1381 = vsel %vm1375, %v1378, %v1380
    %v1382 = vsel %vm1374, %v1361, %v1364
    %v1383 = vsel %vm1377, %v1370, 920167782
    %v1384 = vsel %vm1376, %v1367, %v1383
    %v1385 = vsel %vm1375, %v1382, %v1384
    %v1386 = vsel %vm1374, %v1364, %v1367
    %v1387 = vsel %vm1377, %v1373, 1326507024
    %v1388 = vsel %vm1376, %v1370, %v1387
    %v1389 = vsel %vm1375, %v1386, %v1388
    %v1390 = vshll.u32 %v1350, 8
    %v1391 = vmul.u32.u64.compose %v1390, %v1389
    %v1392 = vextract.low.u32 %v1391
    %v1393 = vextract.high.u32 %v1391
    %v1394 = vmul.u32.u64.compose %v1390, %v1385
    %v1395 = vextract.low.u32 %v1394
    %v1396 = vextract.high.u32 %v1394
    %v1397 = vmul.u32 %v1390, %v1381
    %v1398 = vadd.s32 %v1393, %v1395
    %vm1399 = vc.u32 %v1393, %v1395
    %v1400 = vadd.s32 %v1396, 1
    %v1401 = vsel %vm1399, %v1400, %v1396
    %v1402 = vadd.s32 %v1397, %v1401
    %v1403 = vadd.s32 %v1402, 536870912
    %v1404 = vshrl.u32 %v1403, 30
    %v1405 = vshll.u32 %v1404, 30
    %v1406 = vsub.s32 %v1402, %v1405
    %vm1407 = vcmp.lt.s32.totalorder %v1406, 0
    %v1408 = vsub.s32 0, %v1406
    %v1409 = vsel %vm1407, %v1408, %v1406
    %v1410 = vclz %v1409
    %v1411 = vsub.s32 %v1410, 2
    %vm1412 = vcmp.gt.s32.totalorder 0, %v1411
    %v1413 = vsel %vm1412, 0, %v1411
    %v1414 = vsub.s32 32, %v1413
    %v1415 = vshll.u32 %v1406, %v1413
    %v1416 = vshrl.u32 %v1398, %v1414
    %v1417 = vor.u32 %v1415, %v1416
    %v1418 = vsub.s32 4294967266, %v1413
    %v1419 = vadd.s32 %v1418, 127
    %v1420 = vshll.u32 %v1419, 23
    %v1421 = vor.u32 4788187, %v1420
    %v1422 = vand.u32 2147483647, %v1421
    %v1424 = vcvt.s32.f32 %v1417
    %v1425 = vmul.f32 %v1424, %v1422
    %v1426 = vxor.u32 %v1425, 2147483648
    %v1427 = vsel %vm1344, %v1426, %v1425
    %v1428 = vsub.s32 4, %v1404
    %v1429 = vsel %vm1344, %v1428, %v1404
    %v1430 = vsel %vm1343, %v970, %v1427
    %v1431 = vsel %vm1343, 0, %v1429
    %v1432 = vcosq.f32.pop %v1430
    %v1433 = vsinq.f32.pop %v1430
    %vm1434 = vweird.f32 %v970
    %v1435 = vadd.s32 %v1431, 3
    %v1436 = vand.u32 %v1435, 3
    %vm1437 = vcmp.lt.s32.totalorder %v1436, 2
    %vm1438 = vcmp.eq.s32.totalorder %v1436, 0
    %v1439 = vxor.u32 %v1433, 2147483648
    %v1440 = vsel %vm1438, %v1432, %v1439
    %vm1441 = vcmp.eq.s32.totalorder %v1436, 2
    %v1442 = vxor.u32 %v1432, 2147483648
    %v1443 = vsel %vm1441, %v1442, %v1433
    %v1444 = vsel %vm1437, %v1440, %v1443
    %v1445 = vsel %vm1434, nan, %v1444
    %v1446 = vsub.f32 %v970, %v972
    %v1447 = vand.u32 2147483647, %v1446
    %vm1448 = vcmp.le.f32.partialorder %v1447, 0.7853982
    %vm1449 = vcmp.lt.s32.totalorder %v1446, 0
    %v1450 = vand.u32 %v1446, 2139095040
    %v1451 = vshrl.u32 %v1450, 23
    %v1452 = vsub.s32 %v1451, 127
    %v1453 = vand.u32 2147483647, %v1446
    %v1454 = vand.u32 %v1453, 8388607
    %v1455 = vor.u32 %v1454, 8388608
    %v1456 = vsub.s32 0, %v1455
    %v1457 = vadd.s32 %v1452, 1
    %vm1458 = vcmp.gt.s32.totalorder %v1457, 0
    %v1459 = vsel %vm1458, %v1457, 0
    %v1460 = vshrl.u32 %v1459, 5
    %v1461 = vand.u32 %v1459, 31
    %v1462 = vsub.s32 32, %v1461
    %v1463 = vshrl.u32 683565275, %v1462
    %v1464 = vshll.u32 683565275, %v1461
    %v1465 = vshrl.u32 2475754826, %v1462
    %v1466 = vor.u32 %v1464, %v1465
    %v1467 = vshll.u32 2475754826, %v1461
    %v1468 = vshrl.u32 2131351028, %v1462
    %v1469 = vor.u32 %v1467, %v1468
    %v1470 = vshll.u32 2131351028, %v1461
    %v1471 = vshrl.u32 2102212464, %v1462
    %v1472 = vor.u32 %v1470, %v1471
    %v1473 = vshll.u32 2102212464, %v1461
    %v1474 = vshrl.u32 920167782, %v1462
    %v1475 = vor.u32 %v1473, %v1474
    %v1476 = vshll.u32 920167782, %v1461
    %v1477 = vshrl.u32 1326507024, %v1462
    %v1478 = vor.u32 %v1476, %v1477
    %vm1479 = vcmp.lt.s32.totalorder %v1460, 1
    %vm1480 = vcmp.lt.s32.totalorder %v1460, 2
    %vm1481 = vcmp.lt.s32.totalorder %v1460, 3
    %vm1482 = vcmp.lt.s32.totalorder %v1460, 4
    %v1483 = vsel %vm1479, %v1463, %v1466
    %v1484 = vsel %vm1482, %v1472, 2102212464
    %v1485 = vsel %vm1481, %v1469, %v1484
    %v1486 = vsel %vm1480, %v1483, %v1485
    %v1487 = vsel %vm1479, %v1466, %v1469
    %v1488 = vsel %vm1482, %v1475, 920167782
    %v1489 = vsel %vm1481, %v1472, %v1488
    %v1490 = vsel %vm1480, %v1487, %v1489
    %v1491 = vsel %vm1479, %v1469, %v1472
    %v1492 = vsel %vm1482, %v1478, 1326507024
    %v1493 = vsel %vm1481, %v1475, %v1492
    %v1494 = vsel %vm1480, %v1491, %v1493
    %v1495 = vshll.u32 %v1455, 8
    %v1496 = vmul.u32.u64.compose %v1495, %v1494
    %v1497 = vextract.low.u32 %v1496
    %v1498 = vextract.high.u32 %v1496
    %v1499 = vmul.u32.u64.compose %v1495, %v1490
    %v1500 = vextract.low.u32 %v1499
    %v1501 = vextract.high.u32 %v1499
    %v1502 = vmul.u32 %v1495, %v1486
    %v1503 = vadd.s32 %v1498, %v1500
    %vm1504 = vc.u32 %v1498, %v1500
    %v1505 = vadd.s32 %v1501, 1
    %v1506 = vsel %vm1504, %v1505, %v1501
    %v1507 = vadd.s32 %v1502, %v1506
    %v1508 = vadd.s32 %v1507, 536870912
    %v1509 = vshrl.u32 %v1508, 30
    %v1510 = vshll.u32 %v1509, 30
    %v1511 = vsub.s32 %v1507, %v1510
    %vm1512 = vcmp.lt.s32.totalorder %v1511, 0
    %v1513 = vsub.s32 0, %v1511
    %v1514 = vsel %vm1512, %v1513, %v1511
    %v1515 = vclz %v1514
    %v1516 = vsub.s32 %v1515, 2
    %vm1517 = vcmp.gt.s32.totalorder 0, %v1516
    %v1518 = vsel %vm1517, 0, %v1516
    %v1519 = vsub.s32 32, %v1518
    %v1520 = vshll.u32 %v1511, %v1518
    %v1521 = vshrl.u32 %v1503, %v1519
    %v1522 = vor.u32 %v1520, %v1521
    %v1523 = vsub.s32 4294967266, %v1518
    %v1524 = vadd.s32 %v1523, 127
    %v1525 = vshll.u32 %v1524, 23
    %v1526 = vor.u32 4788187, %v1525
    %v1527 = vand.u32 2147483647, %v1526
    %v1529 = vcvt.s32.f32 %v1522
    %v1530 = vmul.f32 %v1529, %v1527
    %v1531 = vxor.u32 %v1530, 2147483648
    %v1532 = vsel %vm1449, %v1531, %v1530
    %v1533 = vsub.s32 4, %v1509
    %v1534 = vsel %vm1449, %v1533, %v1509
    %v1535 = vsel %vm1448, %v1446, %v1532
    %v1536 = vsel %vm1448, 0, %v1534
    %v1537 = vcosq.f32.pop %v1535
    %v1538 = vsinq.f32.pop %v1535
    %vm1539 = vweird.f32 %v1446
    %v1540 = vand.u32 %v1536, 3
    %vm1541 = vcmp.lt.s32.totalorder %v1540, 2
    %vm1542 = vcmp.eq.s32.totalorder %v1540, 0
    %v1543 = vxor.u32 %v1538, 2147483648
    %v1544 = vsel %vm1542, %v1537, %v1543
    %vm1545 = vcmp.eq.s32.totalorder %v1540, 2
    %v1546 = vxor.u32 %v1537, 2147483648
    %v1547 = vsel %vm1545, %v1546, %v1538
    %v1548 = vsel %vm1541, %v1544, %v1547
    %v1549 = vsel %vm1539, nan, %v1548
    %v1550 = vand.u32 2147483647, %v1446
    %vm1551 = vcmp.le.f32.partialorder %v1550, 0.7853982
    %vm1552 = vcmp.lt.s32.totalorder %v1446, 0
    %v1553 = vand.u32 %v1446, 2139095040
    %v1554 = vshrl.u32 %v1553, 23
    %v1555 = vsub.s32 %v1554, 127
    %v1556 = vand.u32 2147483647, %v1446
    %v1557 = vand.u32 %v1556, 8388607
    %v1558 = vor.u32 %v1557, 8388608
    %v1559 = vsub.s32 0, %v1558
    %v1560 = vadd.s32 %v1555, 1
    %vm1561 = vcmp.gt.s32.totalorder %v1560, 0
    %v1562 = vsel %vm1561, %v1560, 0
    %v1563 = vshrl.u32 %v1562, 5
    %v1564 = vand.u32 %v1562, 31
    %v1565 = vsub.s32 32, %v1564
    %v1566 = vshrl.u32 683565275, %v1565
    %v1567 = vshll.u32 683565275, %v1564
    %v1568 = vshrl.u32 2475754826, %v1565
    %v1569 = vor.u32 %v1567, %v1568
    %v1570 = vshll.u32 2475754826, %v1564
    %v1571 = vshrl.u32 2131351028, %v1565
    %v1572 = vor.u32 %v1570, %v1571
    %v1573 = vshll.u32 2131351028, %v1564
    %v1574 = vshrl.u32 2102212464, %v1565
    %v1575 = vor.u32 %v1573, %v1574
    %v1576 = vshll.u32 2102212464, %v1564
    %v1577 = vshrl.u32 920167782, %v1565
    %v1578 = vor.u32 %v1576, %v1577
    %v1579 = vshll.u32 920167782, %v1564
    %v1580 = vshrl.u32 1326507024, %v1565
    %v1581 = vor.u32 %v1579, %v1580
    %vm1582 = vcmp.lt.s32.totalorder %v1563, 1
    %vm1583 = vcmp.lt.s32.totalorder %v1563, 2
    %vm1584 = vcmp.lt.s32.totalorder %v1563, 3
    %vm1585 = vcmp.lt.s32.totalorder %v1563, 4
    %v1586 = vsel %vm1582, %v1566, %v1569
    %v1587 = vsel %vm1585, %v1575, 2102212464
    %v1588 = vsel %vm1584, %v1572, %v1587
    %v1589 = vsel %vm1583, %v1586, %v1588
    %v1590 = vsel %vm1582, %v1569, %v1572
    %v1591 = vsel %vm1585, %v1578, 920167782
    %v1592 = vsel %vm1584, %v1575, %v1591
    %v1593 = vsel %vm1583, %v1590, %v1592
    %v1594 = vsel %vm1582, %v1572, %v1575
    %v1595 = vsel %vm1585, %v1581, 1326507024
    %v1596 = vsel %vm1584, %v1578, %v1595
    %v1597 = vsel %vm1583, %v1594, %v1596
    %v1598 = vshll.u32 %v1558, 8
    %v1599 = vmul.u32.u64.compose %v1598, %v1597
    %v1600 = vextract.low.u32 %v1599
    %v1601 = vextract.high.u32 %v1599
    %v1602 = vmul.u32.u64.compose %v1598, %v1593
    %v1603 = vextract.low.u32 %v1602
    %v1604 = vextract.high.u32 %v1602
    %v1605 = vmul.u32 %v1598, %v1589
    %v1606 = vadd.s32 %v1601, %v1603
    %vm1607 = vc.u32 %v1601, %v1603
    %v1608 = vadd.s32 %v1604, 1
    %v1609 = vsel %vm1607, %v1608, %v1604
    %v1610 = vadd.s32 %v1605, %v1609
    %v1611 = vadd.s32 %v1610, 536870912
    %v1612 = vshrl.u32 %v1611, 30
    %v1613 = vshll.u32 %v1612, 30
    %v1614 = vsub.s32 %v1610, %v1613
    %vm1615 = vcmp.lt.s32.totalorder %v1614, 0
    %v1616 = vsub.s32 0, %v1614
    %v1617 = vsel %vm1615, %v1616, %v1614
    %v1618 = vclz %v1617
    %v1619 = vsub.s32 %v1618, 2
    %vm1620 = vcmp.gt.s32.totalorder 0, %v1619
    %v1621 = vsel %vm1620, 0, %v1619
    %v1622 = vsub.s32 32, %v1621
    %v1623 = vshll.u32 %v1614, %v1621
    %v1624 = vshrl.u32 %v1606, %v1622
    %v1625 = vor.u32 %v1623, %v1624
    %v1626 = vsub.s32 4294967266, %v1621
    %v1627 = vadd.s32 %v1626, 127
    %v1628 = vshll.u32 %v1627, 23
    %v1629 = vor.u32 4788187, %v1628
    %v1630 = vand.u32 2147483647, %v1629
    %v1632 = vcvt.s32.f32 %v1625
    %v1633 = vmul.f32 %v1632, %v1630
    %v1634 = vxor.u32 %v1633, 2147483648
    %v1635 = vsel %vm1552, %v1634, %v1633
    %v1636 = vsub.s32 4, %v1612
    %v1637 = vsel %vm1552, %v1636, %v1612
    %v1638 = vsel %vm1551, %v1446, %v1635
    %v1639 = vsel %vm1551, 0, %v1637
    %v1640 = vcosq.f32.pop %v1638
    %v1641 = vsinq.f32.pop %v1638
    %vm1642 = vweird.f32 %v1446
    %v1643 = vadd.s32 %v1639, 3
    %v1644 = vand.u32 %v1643, 3
    %vm1645 = vcmp.lt.s32.totalorder %v1644, 2
    %vm1646 = vcmp.eq.s32.totalorder %v1644, 0
    %v1647 = vxor.u32 %v1641, 2147483648
    %v1648 = vsel %vm1646, %v1640, %v1647
    %vm1649 = vcmp.eq.s32.totalorder %v1644, 2
    %v1650 = vxor.u32 %v1640, 2147483648
    %v1651 = vsel %vm1649, %v1650, %v1641
    %v1652 = vsel %vm1645, %v1648, %v1651
    %v1653 = vsel %vm1642, nan, %v1652
    %v1654 = vmul.f32 %v1549, %v1238
    %v1655 = vmul.f32 %v1653, %v1238
    %v1656 = vmul.f32 %v1341, %v1134
    %v1657 = vmul.f32 %v1445, %v1134
    %v1658 = vsub.f32 0.0, %v1654
    %v1659 = vsub.f32 0.0, %v1656
    %v1661 = vlaneseq
    %v1662 = vshrl.u32 %v1661, 7
    %v1663 = vsub.s32 0, %v1662
    %v1664 = vrot.slane %v1658, %v1663
    %v1665 = vlaneseq
    %v1666 = vshrl.u32 %v1665, 7
    %v1667 = vsub.s32 1, %v1666
    %v1668 = vrot.slane %v1658, %v1667
    %v1672 = vlaneseq
    %v1673 = vshrl.u32 %v1672, 7
    %v1674 = vsub.s32 0, %v1673
    %v1675 = vrot.slane %v1659, %v1674
    %v1676 = vlaneseq
    %v1677 = vshrl.u32 %v1676, 7
    %v1678 = vsub.s32 1, %v1677
    %v1679 = vrot.slane %v1659, %v1678
    %v1682 = vsub.f32 0.0, %v1655
    %v1684 = vlaneseq
    %v1685 = vshrl.u32 %v1684, 7
    %v1686 = vsub.s32 0, %v1685
    %v1687 = vrot.slane %v1682, %v1686
    %v1688 = vlaneseq
    %v1689 = vshrl.u32 %v1688, 7
    %v1690 = vsub.s32 1, %v1689
    %v1691 = vrot.slane %v1682, %v1690
    %v1693 = vlaneseq
    %v1694 = vshrl.u32 %v1693, 7
    %v1695 = vsub.s32 0, %v1694
    %v1696 = vrot.slane %v1657, %v1695
    %v1697 = vlaneseq
    %v1698 = vshrl.u32 %v1697, 7
    %v1699 = vsub.s32 1, %v1698
    %v1700 = vrot.slane %v1657, %v1699
    %v1702 = vlaneseq
    %v1703 = vshrl.u32 %v1702, 7
    %v1704 = vsub.s32 0, %v1703
    %v1705 = vrot.slane %v1655, %v1704
    %v1706 = vlaneseq
    %v1707 = vshrl.u32 %v1706, 7
    %v1708 = vsub.s32 1, %v1707
    %v1709 = vrot.slane %v1655, %v1708
    %v1711 = vlaneseq
    %v1712 = vshrl.u32 %v1711, 7
    %v1713 = vsub.s32 0, %v1712
    %v1714 = vrot.slane %v1656, %v1713
    %v1715 = vlaneseq
    %v1716 = vshrl.u32 %v1715, 7
    %v1717 = vsub.s32 1, %v1716
    %v1718 = vrot.slane %v1656, %v1717
    %v1719 = vrot.slane %v1687, 7
    %v1720 = vrot.slane %v1691, 7
    %v1721 = vrot.slane %v1696, 7
    %v1722 = vrot.slane %v1700, 7
    %v1727 = vrot.slane %v1705, 6
    %v1728 = vrot.slane %v1709, 6
    %v1729 = vrot.slane %v1696, 6
    %v1730 = vrot.slane %v1700, 6
    %v1735 = vrot.slane %v1664, 5
    %v1736 = vrot.slane %v1668, 5
    %v1737 = vrot.slane %v1714, 5
    %v1738 = vrot.slane %v1718, 5
    %v1743 = vsel %vm986, %v1664, %v1719
    %v1744 = vsel %vm986, %v1668, %v1720
    %v1745 = vsel %vm986, %v1675, %v1721
    %v1746 = vsel %vm986, %v1679, %v1722
    %vm1747 = vcmask 1041408
    %v1748 = vsel %vm1747, %v1743, %v1727
    %v1749 = vsel %vm1747, %v1744, %v1728
    %v1750 = vsel %vm1747, %v1745, %v1729
    %v1751 = vsel %vm1747, %v1746, %v1730
    %vm1752 = vcmask 1042432
    %v1753 = vsel %vm1752, %v1748, %v1735
    %v1754 = vsel %vm1752, %v1749, %v1736
    %v1755 = vsel %vm1752, %v1750, %v1737
    %v1756 = vsel %vm1752, %v1751, %v1738
    %v1761 = vrot.slane %v1753, 6
    %v1762 = vrot.slane %v1754, 6
    %v1763 = vrot.slane %v1755, 6
    %v1764 = vrot.slane %v1756, 6
    %v1769 = vsel %vm1747, %v881, %v1761
    %v1770 = vsel %vm1747, %v883, %v1762
    %v1771 = vsel %vm1747, %v963, %v1763
    %v1772 = vsel %vm1747, %v965, %v1764
    %1773 = vst [vmem:[%s2] sm:$0x3f] %v1769
    %1774 = vst [vmem:[%s2 + $0x8] sm:$0x3f] %v1770
    %1775 = vst [vmem:[%s2 + $0x10] sm:$0x3f] %v1771
    %1776 = vst [vmem:[%s2 + $0x18] sm:$0x3f] %v1772
    // Predicated region
    $region14: #{dt_layer_forward.1} parent=1 // pred_check
      _
    $region15: #{dt_layer_forward.1} parent=1 // pred_check_branch
      %1778 = sbr.rel (0) target = $region17
    $region16: #{dt_layer_forward.1} parent=1 // pred_region
      _
    $region17: #{dt_layer_forward.1} parent=1 // pred_fallthru
      _
    // Predicated region
    $region18: #{dt_layer_forward.1} parent=1 // pred_check
      _
    $region19: #{dt_layer_forward.1} parent=1 // pred_check_branch
      %1780 = sbr.rel (0) target = $region21
    $region20: #{dt_layer_forward.1} parent=1 // pred_region
      _
    $region21: #{dt_layer_forward.1} parent=1 // pred_fallthru
      _
    %1781 = vsyncpa [#allocation3], 1

</llo_original>
